<compile_context>
chip_gen: v6e
topology: v6e:2x2x1
jax: 0.10.0
libtpu: 0.0.40
codegen_flags: <defaults>
</compile_context>

<pallas_src>
import functools

import jax
import jax.numpy as jnp
from jax.experimental import pallas as pl
from jax.experimental.pallas import tpu as pltpu


def _round_up(x, m):
    return (x + m - 1) // m * m


def _contact_kernel(ref_ref, msa_ref, pwr_ref, pwm_ref, pb_ref, bw_ref, bb_ref,
                    out_ref, msa_acc_ref, fused_ref, fused_t_ref,
                    *, inv_num_seqs, seq_tile, row_tile, bf16_slab_sum):
    # ref_ref   : (1, Lp, Drp)      bf16 reference-sequence embeddings (one batch row)
    # msa_ref   : (1, TS, Lp, Dmp)  bf16 MSA embedding slice (TS sequences)
    # pwr_ref   : (Drp, Drp)        bf16 fusion-projection weight, ref part (x @ W)
    # pwm_ref   : (Dmp, Drp)        bf16 fusion-projection weight, MSA part
    # pb_ref    : (1, Drp)          f32  fusion-projection bias
    # bw_ref    : (Drp, Drp)        bf16 bilinear contact-head weight (out_features=1)
    # bb_ref    : (1,)              f32  bilinear bias (SMEM scalar)
    # out_ref   : (1, Lp, Lp)       contact probabilities (out_dtype)
    # msa_acc_ref : (Lp, Dmp) f32   running sum over MSA sequences (scratch)
    # fused_ref   : (Lp, Drp) bf16  fused per-residue features (scratch)
    # fused_t_ref : (Drp, Lp) bf16  fused^T, transposed once (scratch)
    s = pl.program_id(1)
    ns = pl.num_programs(1)

    @pl.when(s == 0)
    def _():
        msa_acc_ref[...] = jnp.zeros_like(msa_acc_ref)

    # --- Streaming S-sum: slab-by-slab so only one (Lp, Dmp) slab is live. ---
    if bf16_slab_sum:
        # Pairwise bf16 tree (v7x VPU relief), single f32 convert per step.
        slabs = [msa_ref[0, t] for t in range(seq_tile)]
        while len(slabs) > 1:
            nxt = [slabs[i] + slabs[i + 1] for i in range(0, len(slabs) - 1, 2)]
            if len(slabs) % 2:
                nxt.append(slabs[-1])
            slabs = nxt
        msa_acc_ref[...] += slabs[0].astype(jnp.float32)
    else:
        # Exact path: bf16 loads, f32 accumulation (convert fuses into the add).
        acc = msa_acc_ref[...]
        for t in range(seq_tile):
            acc = acc + msa_ref[0, t].astype(jnp.float32)
        msa_acc_ref[...] = acc

    # --- Finalize: mean -> fusion projection -> chunked bilinear head. ---
    @pl.when(s == ns - 1)
    def _():
        ref = ref_ref[0]                                            # (Lp, Drp) bf16
        msa_mean = (msa_acc_ref[...] * inv_num_seqs).astype(ref.dtype)

        # concat([ref, msa_mean]) @ W  ==  ref @ W_ref + msa_mean @ W_msa
        fused = (
            jnp.dot(ref, pwr_ref[...], preferred_element_type=jnp.float32)
            + jnp.dot(msa_mean, pwm_ref[...], preferred_element_type=jnp.float32)
            + pb_ref[...]
        )                                                           # (Lp, Drp) f32
        fused_ref[...] = fused.astype(fused_ref.dtype)
        # Transpose once (f32 XLU transpose, cast on store) so the per-chunk
        # contraction has its contracted dim as the RHS leading dim.
        fused_t_ref[...] = fused.T.astype(fused_t_ref.dtype)

        n_chunks = fused_ref.shape[0] // row_tile
        bias = bb_ref[0]

        # Bilinear head in row chunks: logits[i, j] = fused[i] @ W @ fused[j] + b
        @pl.loop(0, n_chunks)
        def _(c):
            r0 = pl.multiple_of(c * row_tile, row_tile)
            rows = fused_ref[pl.ds(r0, row_tile), :]                # (rt, Drp) bf16
            t_chunk = jnp.dot(rows, bw_ref[...],
                              preferred_element_type=jnp.float32)   # (rt, Drp) f32
            logits = jnp.dot(t_chunk.astype(fused_t_ref.dtype), fused_t_ref[...],
                             preferred_element_type=jnp.float32) + bias
            out_ref[0, pl.ds(r0, row_tile), :] = (
                jax.nn.sigmoid(logits).astype(out_ref.dtype))


def contact_predict(ref_emb, msa_emb, proj_w, proj_b, bil_w, bil_b, *,
                    seq_tile=None, out_dtype=jnp.float32, bf16_slab_sum=False):
    """ref_emb: (B, L, Dr), msa_emb: (B, S, L, Dm) -> contact_probs (B, L, L).

    Note: keep B >= 2 (ideally even) on v7x so both TensorCores get a slice of
    the "parallel" batch axis.
    """
    B, L, Dr = ref_emb.shape
    _, S, _, Dm = msa_emb.shape

    # Lane / MXU friendly padding (satisfies the (8,128) rule, fills MXU dims,
    # keeps the output lane-dense; padding is cropped after the kernel).
    Lp = _round_up(L, 128)
    Drp = _round_up(Dr, 128)
    Dmp = _round_up(Dm, 128)

    try:
        vmem_cap = int(pltpu.get_tpu_info().vmem_capacity_bytes)
    except Exception:
        vmem_cap = 64 << 20  # conservative (v7x per-TC)

    if seq_tile is None:
        seq_tile = 4 if vmem_cap <= (64 << 20) else 8
    TS = max(1, min(seq_tile, S))
    Sp = _round_up(S, TS)
    row_tile = 256 if (Lp % 256 == 0) else 128

    # bf16 data movement, zero padding (padded MSA rows contribute 0 to the sum;
    # the divide uses the true S, so the mean is exact).
    ref_p = jnp.pad(ref_emb.astype(jnp.bfloat16),
                    ((0, 0), (0, Lp - L), (0, Drp - Dr)))
    msa_p = jnp.pad(msa_emb.astype(jnp.bfloat16),
                    ((0, 0), (0, Sp - S), (0, Lp - L), (0, Dmp - Dm)))
    pw_r = jnp.pad(proj_w[:Dr].astype(jnp.bfloat16),
                   ((0, Drp - Dr), (0, Drp - Dr)))
    pw_m = jnp.pad(proj_w[Dr:].astype(jnp.bfloat16),
                   ((0, Dmp - Dm), (0, Drp - Dr)))
    pb_p = jnp.pad(proj_b.astype(jnp.float32), (0, Drp - Dr)).reshape(1, Drp)
    bw_p = jnp.pad(bil_w.astype(jnp.bfloat16),
                   ((0, Drp - Dr), (0, Drp - Dr)))
    bb = bil_b.astype(jnp.float32).reshape(1)

    out_bytes = jnp.dtype(out_dtype).itemsize

    # VMEM budget: double-buffered streaming blocks, single-buffered weights,
    # resident output block, scratch, and bounded finalize temporaries.
    est = (
        2 * Lp * Drp * 2                    # ref double-buffer (bf16)
        + 2 * TS * Lp * Dmp * 2             # msa double-buffer (bf16)
        + (2 * Drp * Drp + Dmp * Drp) * 2   # weights, single-buffered (bf16)
        + Drp * 4                           # projection bias (f32)
        + 2 * Lp * Lp * out_bytes           # output double-buffer
        + Lp * Dmp * 4                      # msa_acc scratch (f32)
        + 2 * Lp * Drp * 2                  # fused / fused^T scratch (bf16)
        + Lp * Drp * 4                      # fused f32 temporary
        + row_tile * (Drp + Lp) * 4         # per-chunk t / logits temporaries
    )
    vmem_limit = max(32 << 20, min(int(est * 1.3) + (4 << 20), vmem_cap))

    flops = (2 * B * Lp * Drp * (Drp + Dmp)     # fusion projection
             + 2 * B * Lp * Drp * Drp           # fused @ W
             + 2 * B * Lp * Lp * Drp)           # (fused @ W) @ fused^T
    transcendentals = B * Lp * Lp               # sigmoid
    bytes_accessed = (
        B * Lp * Drp * 2 + B * Sp * Lp * Dmp * 2
        + (2 * Drp * Drp + Dmp * Drp) * 2 + Drp * 4
        + B * Lp * Lp * out_bytes
    )

    kernel = functools.partial(
        _contact_kernel, inv_num_seqs=1.0 / S, seq_tile=TS,
        row_tile=row_tile, bf16_slab_sum=bf16_slab_sum)

    out_p = pl.pallas_call(
        kernel,
        out_shape=jax.ShapeDtypeStruct((B, Lp, Lp), out_dtype),
        grid_spec=pltpu.PrefetchScalarGridSpec(
            num_scalar_prefetch=0,
            grid=(B, Sp // TS),
            in_specs=[
                pl.BlockSpec((1, Lp, Drp), lambda b, s: (b, 0, 0)),
                pl.BlockSpec((1, TS, Lp, Dmp), lambda b, s: (b, s, 0, 0)),
                # Constant-index weights: fetched once, single-buffered.
                pl.BlockSpec((Drp, Drp), lambda b, s: (0, 0),
                             pipeline_mode=pl.Buffered(1)),
                pl.BlockSpec((Dmp, Drp), lambda b, s: (0, 0),
                             pipeline_mode=pl.Buffered(1)),
                pl.BlockSpec((1, Drp), lambda b, s: (0, 0),
                             pipeline_mode=pl.Buffered(1)),
                pl.BlockSpec((Drp, Drp), lambda b, s: (0, 0),
                             pipeline_mode=pl.Buffered(1)),
                pl.BlockSpec(memory_space=pltpu.MemorySpace.SMEM),
            ],
            out_specs=pl.BlockSpec((1, Lp, Lp), lambda b, s: (b, 0, 0)),
            scratch_shapes=[
                pltpu.VMEM((Lp, Dmp), jnp.float32),    # running S-sum
                pltpu.VMEM((Lp, Drp), jnp.bfloat16),   # fused
                pltpu.VMEM((Drp, Lp), jnp.bfloat16),   # fused^T
            ],
        ),
        compiler_params=pltpu.CompilerParams(
            dimension_semantics=("parallel", "arbitrary"),
            vmem_limit_bytes=vmem_limit,
        ),
        cost_estimate=pl.CostEstimate(
            flops=flops, transcendentals=transcendentals,
            bytes_accessed=bytes_accessed),
    )(ref_p, msa_p, pw_r, pw_m, pb_p, bw_p, bb)

    # Crop the lane-padding (padded rows/cols of the sigmoid map are garbage by
    # construction and must not be consumed).
    return out_p[:, :L, :L]


def reference_forward(ref_emb, msa_emb, proj_w, proj_b, bil_w, bil_b):
    """Pure-JAX reference mirroring the PyTorch forward semantics."""
    msa_mean = msa_emb.mean(axis=1)                             # (B, L, Dm)
    fused = jnp.concatenate([ref_emb, msa_mean], axis=-1)       # (B, L, Dr+Dm)
    fused = fused @ proj_w + proj_b                             # (B, L, Dr)
    logits = jnp.einsum("bid,de,bje->bij", fused, bil_w, fused) + bil_b
    return jax.nn.sigmoid(logits)


if __name__ == "__main__":
    # Small, deterministic problem sizes consistent with the module's forward:
    #   ref_tokens: (B, L+2)   msa_tokens: (B, num_seqs, L+2)
    B = 2
    NUM_SEQS = 4
    LP2 = 8            # L + 2
    REF_DIM = 32       # "esm_model.embed_dim"
    MSA_DIM = 64       # "msa_model.embed_dim"
    VOCAB = 33         # ESM alphabet size

    key = jax.random.PRNGKey(0)
    keys = jax.random.split(key, 8)

    ref_tokens = jax.random.randint(keys[0], (B, LP2), 0, VOCAB)
    msa_tokens = jax.random.randint(keys[1], (B, NUM_SEQS, LP2), 0, VOCAB)

    # Deterministic stand-ins for the pretrained encoders (embedding tables).
    ref_table = jax.random.normal(keys[2], (VOCAB, REF_DIM), jnp.float32) * 0.5
    msa_table = jax.random.normal(keys[3], (VOCAB, MSA_DIM), jnp.float32) * 0.5

    # Fusion projection (Linear: fused_dim -> ref_dim), stored in x@W orientation.
    proj_w = jax.random.normal(keys[4], (REF_DIM + MSA_DIM, REF_DIM), jnp.float32) * 0.1
    proj_b = jax.random.normal(keys[5], (REF_DIM,), jnp.float32) * 0.1

    # Bilinear contact head (out_features = 1).
    bil_w = jax.random.normal(keys[6], (REF_DIM, REF_DIM), jnp.float32) * 0.1
    bil_b = jax.random.normal(keys[7], (1,), jnp.float32) * 0.1

    # Plain-JAX glue: "encoder" embedding lookups.
    ref_emb = ref_table[ref_tokens]          # (B, L+2, REF_DIM)
    msa_emb = msa_table[msa_tokens]          # (B, num_seqs, L+2, MSA_DIM)

    contact_probs = contact_predict(ref_emb, msa_emb, proj_w, proj_b, bil_w, bil_b)
    contact_probs = jax.block_until_ready(contact_probs)

    # Reference with the same bf16-rounded operands (kernel moves data as bf16,
    # accumulates in f32; msa_mean/fused/t are additionally bf16-rounded before
    # their MXU matmuls, which stays inside the test tolerance at these dims).
    ref_q = ref_emb.astype(jnp.bfloat16).astype(jnp.float32)
    msa_q = msa_emb.astype(jnp.bfloat16).astype(jnp.float32)
    pw_q = proj_w.astype(jnp.bfloat16).astype(jnp.float32)
    bw_q = bil_w.astype(jnp.bfloat16).astype(jnp.float32)
    expected = reference_forward(ref_q, msa_q, pw_q, proj_b, bw_q, bil_b)

    assert contact_probs.shape == (B, LP2, LP2), contact_probs.shape
    max_err = float(jnp.max(jnp.abs(contact_probs - expected)))
    assert jnp.allclose(contact_probs, expected, atol=1e-2, rtol=1e-2), max_err
    print("KERNEL_OK")
</pallas_src>

<mosaic_0001>
module attributes {stable_mosaic.version = 11 : i64} {
  func.func @_contact_kernel(%arg0: i32, %arg1: i32, %arg2: memref<1x128x128xbf16, #tpu.memory_space<vmem>>, %arg3: memref<1x4x128x128xbf16, #tpu.memory_space<vmem>>, %arg4: memref<128x128xbf16, #tpu.memory_space<vmem>>, %arg5: memref<128x128xbf16, #tpu.memory_space<vmem>>, %arg6: memref<1x128xf32, #tpu.memory_space<vmem>>, %arg7: memref<128x128xbf16, #tpu.memory_space<vmem>>, %arg8: memref<1xf32, #tpu.memory_space<smem>>, %arg9: memref<1x128x128xf32, #tpu.memory_space<vmem>>, %arg10: memref<128x128xf32, #tpu.memory_space<vmem>>, %arg11: memref<128x128xbf16, #tpu.memory_space<vmem>>, %arg12: memref<128x128xbf16, #tpu.memory_space<vmem>>) attributes {dimension_semantics = [#tpu.dimension_semantics<parallel>, #tpu.dimension_semantics<arbitrary>], iteration_bounds = array<i64: 2, 1>, scalar_prefetch = 0 : i64, scratch_operands = 3 : i64, tpu.core_type = #tpu.core_type<tc>, window_params = [{transform_indices = @transform_0, window_bounds = array<i64: 1, 128, 128>}, {transform_indices = @transform_1, window_bounds = array<i64: 1, 4, 128, 128>}, {pipeline_mode = #tpu.pipeline_mode<synchronous>, transform_indices = @transform_2, window_bounds = array<i64: 128, 128>}, {pipeline_mode = #tpu.pipeline_mode<synchronous>, transform_indices = @transform_3, window_bounds = array<i64: 128, 128>}, {pipeline_mode = #tpu.pipeline_mode<synchronous>, transform_indices = @transform_4, window_bounds = array<i64: 1, 128>}, {pipeline_mode = #tpu.pipeline_mode<synchronous>, transform_indices = @transform_5, window_bounds = array<i64: 128, 128>}, {transform_indices = @transform_6, window_bounds = array<i64: 1>}, {transform_indices = @transform_7, window_bounds = array<i64: 1, 128, 128>}]} {
    %c0_i32 = arith.constant 0 : i32
    %0 = arith.cmpi eq, %arg1, %c0_i32 : i32
    %1 = arith.extui %0 : i1 to i32
    %c0_i32_0 = arith.constant 0 : i32
    %2 = arith.cmpi ne, %1, %c0_i32_0 : i32
    scf.if %2 {
      %cst = arith.constant 0.000000e+00 : f32
      %24 = vector.broadcast %cst : f32 to vector<128x128xf32>
      %c0_19 = arith.constant 0 : index
      %c0_20 = arith.constant 0 : index
      %25 = vector.load %arg10[%c0_19, %c0_20] : memref<128x128xf32, #tpu.memory_space<vmem>>, vector<128x128xf32>
      tpu.vector_store %arg10[%c0_19, %c0_20], %24 {strides = array<i32>} : memref<128x128xf32, #tpu.memory_space<vmem>>, vector<128x128xf32>,
    } else {
    }
    %c0 = arith.constant 0 : index
    %c0_1 = arith.constant 0 : index
    %3 = vector.load %arg10[%c0, %c0_1] : memref<128x128xf32, #tpu.memory_space<vmem>>, vector<128x128xf32>
    %c0_2 = arith.constant 0 : index
    %c0_3 = arith.constant 0 : index
    %c0_4 = arith.constant 0 : index
    %c0_5 = arith.constant 0 : index
    %4 = vector.load %arg3[%c0_2, %c0_3, %c0_4, %c0_5] : memref<1x4x128x128xbf16, #tpu.memory_space<vmem>>, vector<1x1x128x128xbf16>
    %5 = vector.shape_cast %4 : vector<1x1x128x128xbf16> to vector<128x128xbf16>
    %6 = arith.extf %5 : vector<128x128xbf16> to vector<128x128xf32>
    %7 = arith.addf %3, %6 : vector<128x128xf32>
    %c0_6 = arith.constant 0 : index
    %c1 = arith.constant 1 : index
    %c0_7 = arith.constant 0 : index
    %c0_8 = arith.constant 0 : index
    %8 = vector.load %arg3[%c0_6, %c1, %c0_7, %c0_8] : memref<1x4x128x128xbf16, #tpu.memory_space<vmem>>, vector<1x1x128x128xbf16>
    %9 = vector.shape_cast %8 : vector<1x1x128x128xbf16> to vector<128x128xbf16>
    %10 = arith.extf %9 : vector<128x128xbf16> to vector<128x128xf32>
    %11 = arith.addf %7, %10 : vector<128x128xf32>
    %c0_9 = arith.constant 0 : index
    %c2 = arith.constant 2 : index
    %c0_10 = arith.constant 0 : index
    %c0_11 = arith.constant 0 : index
    %12 = vector.load %arg3[%c0_9, %c2, %c0_10, %c0_11] : memref<1x4x128x128xbf16, #tpu.memory_space<vmem>>, vector<1x1x128x128xbf16>
    %13 = vector.shape_cast %12 : vector<1x1x128x128xbf16> to vector<128x128xbf16>
    %14 = arith.extf %13 : vector<128x128xbf16> to vector<128x128xf32>
    %15 = arith.addf %11, %14 : vector<128x128xf32>
    %c0_12 = arith.constant 0 : index
    %c3 = arith.constant 3 : index
    %c0_13 = arith.constant 0 : index
    %c0_14 = arith.constant 0 : index
    %16 = vector.load %arg3[%c0_12, %c3, %c0_13, %c0_14] : memref<1x4x128x128xbf16, #tpu.memory_space<vmem>>, vector<1x1x128x128xbf16>
    %17 = vector.shape_cast %16 : vector<1x1x128x128xbf16> to vector<128x128xbf16>
    %18 = arith.extf %17 : vector<128x128xbf16> to vector<128x128xf32>
    %19 = arith.addf %15, %18 : vector<128x128xf32>
    %c0_15 = arith.constant 0 : index
    %c0_16 = arith.constant 0 : index
    %20 = vector.load %arg10[%c0_15, %c0_16] : memref<128x128xf32, #tpu.memory_space<vmem>>, vector<128x128xf32>
    tpu.vector_store %arg10[%c0_15, %c0_16], %19 {strides = array<i32>} : memref<128x128xf32, #tpu.memory_space<vmem>>, vector<128x128xf32>,
    %c0_i32_17 = arith.constant 0 : i32
    %21 = arith.cmpi eq, %arg1, %c0_i32_17 : i32
    %22 = arith.extui %21 : i1 to i32
    %c0_i32_18 = arith.constant 0 : i32
    %23 = arith.cmpi ne, %22, %c0_i32_18 : i32
    scf.if %23 {
      %c0_19 = arith.constant 0 : index
      %c0_20 = arith.constant 0 : index
      %c0_21 = arith.constant 0 : index
      %24 = vector.load %arg2[%c0_19, %c0_20, %c0_21] : memref<1x128x128xbf16, #tpu.memory_space<vmem>>, vector<1x128x128xbf16>
      %25 = vector.shape_cast %24 : vector<1x128x128xbf16> to vector<128x128xbf16>
      %c0_22 = arith.constant 0 : index
      %c0_23 = arith.constant 0 : index
      %26 = vector.load %arg10[%c0_22, %c0_23] : memref<128x128xf32, #tpu.memory_space<vmem>>, vector<128x128xf32>
      %cst = arith.constant 2.500000e-01 : f32
      %27 = vector.broadcast %cst : f32 to vector<128x128xf32>
      %28 = arith.mulf %26, %27 : vector<128x128xf32>
      %29 = arith.truncf %28 : vector<128x128xf32> to vector<128x128xbf16>
      %c0_24 = arith.constant 0 : index
      %c0_25 = arith.constant 0 : index
      %30 = vector.load %arg4[%c0_24, %c0_25] : memref<128x128xbf16, #tpu.memory_space<vmem>>, vector<128x128xbf16>
      %cst_26 = arith.constant dense<0.000000e+00> : vector<128x128xf32>
      %31 = tpu.matmul %25, %30, %cst_26 {dimension_numbers = #tpu.dot_dimension_numbers<[1], [0], [0], [1], [0, 0, 1, 1], [], []>} : vector<128x128xbf16>, vector<128x128xbf16>, vector<128x128xf32> -> vector<128x128xf32>
      %c0_27 = arith.constant 0 : index
      %c0_28 = arith.constant 0 : index
      %32 = vector.load %arg5[%c0_27, %c0_28] : memref<128x128xbf16, #tpu.memory_space<vmem>>, vector<128x128xbf16>
      %cst_29 = arith.constant dense<0.000000e+00> : vector<128x128xf32>
      %33 = tpu.matmul %29, %32, %cst_29 {dimension_numbers = #tpu.dot_dimension_numbers<[1], [0], [0], [1], [0, 0, 1, 1], [], []>} : vector<128x128xbf16>, vector<128x128xbf16>, vector<128x128xf32> -> vector<128x128xf32>
      %34 = arith.addf %31, %33 : vector<128x128xf32>
      %c0_30 = arith.constant 0 : index
      %c0_31 = arith.constant 0 : index
      %35 = vector.load %arg6[%c0_30, %c0_31] : memref<1x128xf32, #tpu.memory_space<vmem>>, vector<1x128xf32>
      %36 = vector.broadcast %35 : vector<1x128xf32> to vector<128x128xf32>
      %37 = arith.addf %34, %36 : vector<128x128xf32>
      %38 = arith.truncf %37 : vector<128x128xf32> to vector<128x128xbf16>
      %c0_32 = arith.constant 0 : index
      %c0_33 = arith.constant 0 : index
      %39 = vector.load %arg11[%c0_32, %c0_33] : memref<128x128xbf16, #tpu.memory_space<vmem>>, vector<128x128xbf16>
      tpu.vector_store %arg11[%c0_32, %c0_33], %38 {strides = array<i32>} : memref<128x128xbf16, #tpu.memory_space<vmem>>, vector<128x128xbf16>,
      %40 = tpu.transpose %37, [1, 0] : vector<128x128xf32> -> vector<128x128xf32>
      %41 = arith.truncf %40 : vector<128x128xf32> to vector<128x128xbf16>
      %c0_34 = arith.constant 0 : index
      %c0_35 = arith.constant 0 : index
      %42 = vector.load %arg12[%c0_34, %c0_35] : memref<128x128xbf16, #tpu.memory_space<vmem>>, vector<128x128xbf16>
      tpu.vector_store %arg12[%c0_34, %c0_35], %41 {strides = array<i32>} : memref<128x128xbf16, #tpu.memory_space<vmem>>, vector<128x128xbf16>,
      %c0_36 = arith.constant 0 : index
      %43 = memref.load %arg8[%c0_36] : memref<1xf32, #tpu.memory_space<smem>>
      %c0_i32_37 = arith.constant 0 : i32
      %c1_i32 = arith.constant 1 : i32
      %44 = arith.muli %c0_i32_37, %c1_i32 : i32
      %c0_i32_38 = arith.constant 0 : i32
      %45 = arith.addi %c0_i32_38, %44 : i32
      %c128_i32 = arith.constant 128 : i32
      %46 = arith.muli %45, %c128_i32 : i32
      %47 = tpu.assume_multiple %46, 128 : i32
      %48 = arith.index_cast %47 : i32 to index
      %c0_39 = arith.constant 0 : index
      %49 = vector.load %arg11[%48, %c0_39] : memref<128x128xbf16, #tpu.memory_space<vmem>>, vector<128x128xbf16>
      %c0_40 = arith.constant 0 : index
      %c0_41 = arith.constant 0 : index
      %50 = vector.load %arg7[%c0_40, %c0_41] : memref<128x128xbf16, #tpu.memory_space<vmem>>, vector<128x128xbf16>
      %cst_42 = arith.constant dense<0.000000e+00> : vector<128x128xf32>
      %51 = tpu.matmul %49, %50, %cst_42 {dimension_numbers = #tpu.dot_dimension_numbers<[1], [0], [0], [1], [0, 0, 1, 1], [], []>} : vector<128x128xbf16>, vector<128x128xbf16>, vector<128x128xf32> -> vector<128x128xf32>
      %52 = arith.truncf %51 : vector<128x128xf32> to vector<128x128xbf16>
      %c0_43 = arith.constant 0 : index
      %c0_44 = arith.constant 0 : index
      %53 = vector.load %arg12[%c0_43, %c0_44] : memref<128x128xbf16, #tpu.memory_space<vmem>>, vector<128x128xbf16>
      %cst_45 = arith.constant dense<0.000000e+00> : vector<128x128xf32>
      %54 = tpu.matmul %52, %53, %cst_45 {dimension_numbers = #tpu.dot_dimension_numbers<[1], [0], [0], [1], [0, 0, 1, 1], [], []>} : vector<128x128xbf16>, vector<128x128xbf16>, vector<128x128xf32> -> vector<128x128xf32>
      %55 = vector.broadcast %43 : f32 to vector<128x128xf32>
      %56 = arith.addf %54, %55 : vector<128x128xf32>
      %57 = arith.negf %56 : vector<128x128xf32>
      %58 = math.exp %57 : vector<128x128xf32>
      %cst_46 = arith.constant 1.000000e+00 : f32
      %59 = vector.broadcast %cst_46 : f32 to vector<128x128xf32>
      %60 = arith.addf %59, %58 : vector<128x128xf32>
      %61 = arith.divf %59, %60 : vector<128x128xf32>
      %c0_47 = arith.constant 0 : index
      %62 = arith.index_cast %47 : i32 to index
      %c0_48 = arith.constant 0 : index
      %63 = vector.load %arg9[%c0_47, %62, %c0_48] : memref<1x128x128xf32, #tpu.memory_space<vmem>>, vector<1x128x128xf32>
      %64 = vector.shape_cast %63 : vector<1x128x128xf32> to vector<128x128xf32>
      %65 = vector.shape_cast %61 : vector<128x128xf32> to vector<1x128x128xf32>
      tpu.vector_store %arg9[%c0_47, %62, %c0_48], %65 {strides = array<i32>} : memref<1x128x128xf32, #tpu.memory_space<vmem>>, vector<1x128x128xf32>,
      %c1_i32_49 = arith.constant 1 : i32
    } else {
    }
    return
  }
  func.func @transform_0(%arg0: i32, %arg1: i32) -> (i32, i32, i32) {
    %c0_i32 = arith.constant 0 : i32
    %c0_i32_0 = arith.constant 0 : i32
    %c0_i32_1 = arith.constant 0 : i32
    return %arg0, %c0_i32, %c0_i32_0 : i32, i32, i32
  }
  func.func @transform_1(%arg0: i32, %arg1: i32) -> (i32, i32, i32, i32) {
    %c0_i32 = arith.constant 0 : i32
    %c0_i32_0 = arith.constant 0 : i32
    %c0_i32_1 = arith.constant 0 : i32
    return %arg0, %arg1, %c0_i32, %c0_i32_0 : i32, i32, i32, i32
  }
  func.func @transform_2(%arg0: i32, %arg1: i32) -> (i32, i32) {
    %c0_i32 = arith.constant 0 : i32
    %c0_i32_0 = arith.constant 0 : i32
    %c0_i32_1 = arith.constant 0 : i32
    return %c0_i32, %c0_i32_0 : i32, i32
  }
  func.func @transform_3(%arg0: i32, %arg1: i32) -> (i32, i32) {
    %c0_i32 = arith.constant 0 : i32
    %c0_i32_0 = arith.constant 0 : i32
    %c0_i32_1 = arith.constant 0 : i32
    return %c0_i32, %c0_i32_0 : i32, i32
  }
  func.func @transform_4(%arg0: i32, %arg1: i32) -> (i32, i32) {
    %c0_i32 = arith.constant 0 : i32
    %c0_i32_0 = arith.constant 0 : i32
    %c0_i32_1 = arith.constant 0 : i32
    return %c0_i32, %c0_i32_0 : i32, i32
  }
  func.func @transform_5(%arg0: i32, %arg1: i32) -> (i32, i32) {
    %c0_i32 = arith.constant 0 : i32
    %c0_i32_0 = arith.constant 0 : i32
    %c0_i32_1 = arith.constant 0 : i32
    return %c0_i32, %c0_i32_0 : i32, i32
  }
  func.func @transform_6(%arg0: i32, %arg1: i32) -> i32 {
    %c0_i32 = arith.constant 0 : i32
    %c0_i32_0 = arith.constant 0 : i32
    return %c0_i32 : i32
  }
  func.func @transform_7(%arg0: i32, %arg1: i32) -> (i32, i32, i32) {
    %c0_i32 = arith.constant 0 : i32
    %c0_i32_0 = arith.constant 0 : i32
    %c0_i32_1 = arith.constant 0 : i32
    return %arg0, %c0_i32, %c0_i32_0 : i32, i32, i32
  }
}

</mosaic_0001>

<llo_original>
// kernel: tpu_custom_call.1
$region0: #{tpu_custom_call.1}
  #allocation0 [shape = 'u32[]', space=smem, size = 0x4, offset = 0x4, fixed_abs, tag = 'smem constant byte address 0x4 - core index']
  #allocation1 [shape = 'u32[144,128]{1,0:T(1,128)}', space=vmem, size = 0x12000, scoped, tag = 'internal scratch']
  #allocation2 [shape = 'f32[128,128]{1,0:T(8,128)}', space=vmem, size = 0x10000, scoped, tag = 'scratch operand']
  #allocation3 [shape = 'bf16[128,128]{1,0:T(8,128)(2,1)}', space=vmem, size = 0x8000, scoped, tag = 'scratch operand']
  #allocation4 [shape = 'bf16[128,128]{1,0:T(8,128)(2,1)}', space=vmem, size = 0x8000, scoped, tag = 'scratch operand']
  #allocation5 [shape = 'f32[1]{0:T(128)S(6)}', space=smem, size = 0x200, scoped, tag = 'scoped memory for tpu_custom_call.1']
  %s0 = inlined_call_operand.hbm [shape: bf16[2,128,128], index: 0, kind: input, shape index: {}]
  %s1 = inlined_call_operand.hbm [shape: bf16[2,4,128,128], index: 1, kind: input, shape index: {}]
  %s2 = inlined_call_operand.hbm [shape: bf16[128,128], index: 2, kind: input, shape index: {}]
  %s3 = inlined_call_operand.hbm [shape: bf16[128,128], index: 3, kind: input, shape index: {}]
  %s4 = inlined_call_operand.vmem [shape: f32[1,128], index: 4, kind: input, shape index: {}]
  %s5 = inlined_call_operand.hbm [shape: bf16[128,128], index: 5, kind: input, shape index: {}]
  %s6 = inlined_call_operand.<no memory space> [shape: f32[1], index: 6, kind: input, shape index: {}]
  %s7 = inlined_call_operand.hbm [shape: f32[2,128,128], index: 7, kind: output, shape index: {}]
  %s8 = sld [smem:[#allocation0]]
  $region89: #{tpu_custom_call.1} parent=0
    _
  %s10 = ssub.s32 1, %s8
  %s11 = scalar_select 0, %s10, %s8
  %12 = sst [smem:[#allocation5]] %s6
  $region1: #{tpu_custom_call.1} parent=0
    #allocation6 [shape = 'u8[65536]{0}', space=vmem, size = 0x10000, scoped, tag = 'input window, operand 0']
    #allocation7 [shape = 's32[2]{0}', space=sflag, size = 0x8, scoped, tag = 'scoped memory for tpu_custom_call.1']
    #allocation8 [shape = 's32[2]{0}', space=sflag, size = 0x8, scoped, tag = 'scoped memory for tpu_custom_call.1']
    #allocation9 [shape = 'u8[262144]{0}', space=vmem, size = 0x40000, scoped, tag = 'input window, operand 1']
    #allocation10 [shape = 's32[2]{0}', space=sflag, size = 0x8, scoped, tag = 'scoped memory for tpu_custom_call.1']
    #allocation11 [shape = 'u8[32768]{0}', space=vmem, size = 0x8000, scoped, tag = 'input window, operand 2, single buffered']
    #allocation12 [shape = 'u8[32768]{0}', space=vmem, size = 0x8000, scoped, tag = 'input window, operand 3, single buffered']
    #allocation13 [shape = 's32[1]{0}', space=sflag, size = 0x4, scoped, tag = 'scoped memory for tpu_custom_call.1']
    #allocation14 [shape = 'u8[32768]{0}', space=vmem, size = 0x8000, scoped, tag = 'input window, operand 5, single buffered']
    #allocation15 [shape = 'u8[131072]{0}', space=vmem, size = 0x20000, scoped, tag = 'output window, operand 0']
    %13 = vsyncpa [#allocation7], 0
    %s14 = scalar_lea.sflag [#allocation7], 1
    %15 = vsyncpa %s14, 0
    %16 = vsyncpa [#allocation10], 0
    %s17 = scalar_lea.sflag [#allocation10], 1
    %18 = vsyncpa %s17, 0
    %19 = vsyncpa [#allocation13], 0
    %20 = vsyncpa [#allocation8], 0
    %s21 = scalar_lea.sflag [#allocation8], 1
    %22 = vsyncpa %s21, 0
    loop: start=0, step=1, limit=4
    $region2: #{tpu_custom_call.1} parent=1 // loop_pre_header
      _
    $region3: #{tpu_custom_call.1} parent=1 // loop_header
      %s24 = sphi 0, %s28
      %p25 = scmp.ge.s32.totalorder %s24, 4
      %s31 = sphi 0, %s43
      %s32 = sphi 0, %s39
      %s33 = sphi 0, %s31
      %s34 = sphi 0, %s32
      %s35 = sphi 0, %s33
      %s36 = sphi 0, %s34
      %s46 = sphi 0, %s48
      %s49 = sphi 0, %s46
      %s50 = sphi 0, %s49
      %s66 = sphi 0, %s50
      %s74 = sphi 0, %s76
      %s77 = sphi 0, %s74
      %s78 = sphi 0, %s77
      %s94 = sphi 0, %s78
      %s98 = sphi 0, %s98
      %s100 = sphi 0, %s98
      %s101 = sphi 0, %s100
      %s115 = sphi 0, %s101
      %s119 = sphi 0, %s119
      %s121 = sphi 0, %s119
      %s122 = sphi 0, %s121
      %s136 = sphi 0, %s122
      %s140 = sphi 0, %s140
      %s142 = sphi 0, %s140
      %s143 = sphi 0, %s142
      %s157 = sphi 0, %s143
      %s161 = sphi 0, %s161
      %s163 = sphi 0, %s161
      %s164 = sphi 0, %s163
      %s178 = sphi 0, %s164
      %s182 = sphi 0, %s182
      %s184 = sphi 0, %s182
      %s185 = sphi 0, %s184
      %s199 = sphi 0, %s185
      %s205 = sphi 0, %s207
      %s208 = sphi 0, %s205
      %s209 = sphi 0, %s208
      %s225 = sphi 0, %s209
    $region4: #{tpu_custom_call.1} parent=1 // loop_header_branch
      %27 = sbr.rel (%p25) target = $region8
    $region5: #{tpu_custom_call.1} parent=1 // loop_body
      %s29 = ssub.s32 %s24, 1
      %s30 = ssub.s32 %s24, 2
      %s37 = sadd.s32 1, %s32
      %p38 = scmp.ge.s32.totalorder %s37, 1
      %s39 = scalar_select %p38, 0, %s37
      %s40 = sadd.s32 1, %s31
      %s41 = scalar_select %p38, %s40, %s31
      %p42 = scmp.ge.s32.totalorder %s41, 2
      %s43 = scalar_select %p42, 0, %s41
      %s44 = ssub.s32 %s31, %s43
      %p45 = scmp.eq.s32.totalorder %s44, 0
      %s47 = sadd.s32 %s46, 1
      %s48 = scalar_select %p45, %s46, %s47
      %p51 = pneg %p45
      %p52 = scmp.eq.s32.totalorder %s24, 1
      %p53 = por %p51, %p52
      %p54 = scmp.ne.s32.totalorder %s46, %s49
      %p55 = scmp.eq.s32.totalorder %s24, 0
      %p56 = por %p54, %p55
      %p57 = scmp.ne.s32.totalorder %s46, %s49
      %p58 = scmp.eq.s32.totalorder %s29, 1
      %p59 = por %p57, %p58
      %p60 = scmp.ne.s32.totalorder %s49, %s50
      %p61 = scmp.eq.s32.totalorder %s29, 0
      %p62 = por %p60, %p61
      %p63 = scmp.ne.s32.totalorder %s49, %s50
      %p64 = scmp.eq.s32.totalorder %s30, 1
      %p65 = por %p63, %p64
      %p67 = scmp.ne.s32.totalorder %s50, %s66
      %p68 = scmp.eq.s32.totalorder %s30, 0
      %p69 = por %p67, %p68
      %s70 = ssub.s32 %s31, %s43
      %s71 = ssub.s32 %s32, %s39
      %s72 = sor.u32 %s70, %s71
      %p73 = scmp.eq.s32.totalorder %s72, 0
      %s75 = sadd.s32 %s74, 1
      %s76 = scalar_select %p73, %s74, %s75
      %p79 = pneg %p73
      %p80 = scmp.eq.s32.totalorder %s24, 1
      %p81 = por %p79, %p80
      %p82 = scmp.ne.s32.totalorder %s74, %s77
      %p83 = scmp.eq.s32.totalorder %s24, 0
      %p84 = por %p82, %p83
      %p85 = scmp.ne.s32.totalorder %s74, %s77
      %p86 = scmp.eq.s32.totalorder %s29, 1
      %p87 = por %p85, %p86
      %p88 = scmp.ne.s32.totalorder %s77, %s78
      %p89 = scmp.eq.s32.totalorder %s29, 0
      %p90 = por %p88, %p89
      %p91 = scmp.ne.s32.totalorder %s77, %s78
      %p92 = scmp.eq.s32.totalorder %s30, 1
      %p93 = por %p91, %p92
      %p95 = scmp.ne.s32.totalorder %s78, %s94
      %p96 = scmp.eq.s32.totalorder %s30, 0
      %p97 = por %p95, %p96
      %s99 = sadd.s32 %s98, 1
      %p102 = scmp.eq.s32.totalorder %s24, 1
      %p103 = scmp.ne.s32.totalorder %s98, %s100
      %p104 = scmp.eq.s32.totalorder %s24, 0
      %p105 = por %p103, %p104
      %p106 = scmp.ne.s32.totalorder %s98, %s100
      %p107 = scmp.eq.s32.totalorder %s29, 1
      %p108 = por %p106, %p107
      %p109 = scmp.ne.s32.totalorder %s100, %s101
      %p110 = scmp.eq.s32.totalorder %s29, 0
      %p111 = por %p109, %p110
      %p112 = scmp.ne.s32.totalorder %s100, %s101
      %p113 = scmp.eq.s32.totalorder %s30, 1
      %p114 = por %p112, %p113
      %p116 = scmp.ne.s32.totalorder %s101, %s115
      %p117 = scmp.eq.s32.totalorder %s30, 0
      %p118 = por %p116, %p117
      %s120 = sadd.s32 %s119, 1
      %p123 = scmp.eq.s32.totalorder %s24, 1
      %p124 = scmp.ne.s32.totalorder %s119, %s121
      %p125 = scmp.eq.s32.totalorder %s24, 0
      %p126 = por %p124, %p125
      %p127 = scmp.ne.s32.totalorder %s119, %s121
      %p128 = scmp.eq.s32.totalorder %s29, 1
      %p129 = por %p127, %p128
      %p130 = scmp.ne.s32.totalorder %s121, %s122
      %p131 = scmp.eq.s32.totalorder %s29, 0
      %p132 = por %p130, %p131
      %p133 = scmp.ne.s32.totalorder %s121, %s122
      %p134 = scmp.eq.s32.totalorder %s30, 1
      %p135 = por %p133, %p134
      %p137 = scmp.ne.s32.totalorder %s122, %s136
      %p138 = scmp.eq.s32.totalorder %s30, 0
      %p139 = por %p137, %p138
      %s141 = sadd.s32 %s140, 1
      %p144 = scmp.eq.s32.totalorder %s24, 1
      %p145 = scmp.ne.s32.totalorder %s140, %s142
      %p146 = scmp.eq.s32.totalorder %s24, 0
      %p147 = por %p145, %p146
      %p148 = scmp.ne.s32.totalorder %s140, %s142
      %p149 = scmp.eq.s32.totalorder %s29, 1
      %p150 = por %p148, %p149
      %p151 = scmp.ne.s32.totalorder %s142, %s143
      %p152 = scmp.eq.s32.totalorder %s29, 0
      %p153 = por %p151, %p152
      %p154 = scmp.ne.s32.totalorder %s142, %s143
      %p155 = scmp.eq.s32.totalorder %s30, 1
      %p156 = por %p154, %p155
      %p158 = scmp.ne.s32.totalorder %s143, %s157
      %p159 = scmp.eq.s32.totalorder %s30, 0
      %p160 = por %p158, %p159
      %s162 = sadd.s32 %s161, 1
      %p165 = scmp.eq.s32.totalorder %s24, 1
      %p166 = scmp.ne.s32.totalorder %s161, %s163
      %p167 = scmp.eq.s32.totalorder %s24, 0
      %p168 = por %p166, %p167
      %p169 = scmp.ne.s32.totalorder %s161, %s163
      %p170 = scmp.eq.s32.totalorder %s29, 1
      %p171 = por %p169, %p170
      %p172 = scmp.ne.s32.totalorder %s163, %s164
      %p173 = scmp.eq.s32.totalorder %s29, 0
      %p174 = por %p172, %p173
      %p175 = scmp.ne.s32.totalorder %s163, %s164
      %p176 = scmp.eq.s32.totalorder %s30, 1
      %p177 = por %p175, %p176
      %p179 = scmp.ne.s32.totalorder %s164, %s178
      %p180 = scmp.eq.s32.totalorder %s30, 0
      %p181 = por %p179, %p180
      %s183 = sadd.s32 %s182, 1
      %p186 = scmp.eq.s32.totalorder %s24, 1
      %p187 = scmp.ne.s32.totalorder %s182, %s184
      %p188 = scmp.eq.s32.totalorder %s24, 0
      %p189 = por %p187, %p188
      %p190 = scmp.ne.s32.totalorder %s182, %s184
      %p191 = scmp.eq.s32.totalorder %s29, 1
      %p192 = por %p190, %p191
      %p193 = scmp.ne.s32.totalorder %s184, %s185
      %p194 = scmp.eq.s32.totalorder %s29, 0
      %p195 = por %p193, %p194
      %p196 = scmp.ne.s32.totalorder %s184, %s185
      %p197 = scmp.eq.s32.totalorder %s30, 1
      %p198 = por %p196, %p197
      %p200 = scmp.ne.s32.totalorder %s185, %s199
      %p201 = scmp.eq.s32.totalorder %s30, 0
      %p202 = por %p200, %p201
      %s203 = ssub.s32 %s31, %s43
      %p204 = scmp.eq.s32.totalorder %s203, 0
      %s206 = sadd.s32 %s205, 1
      %s207 = scalar_select %p204, %s205, %s206
      %p210 = pneg %p204
      %p211 = scmp.eq.s32.totalorder %s24, 1
      %p212 = por %p210, %p211
      %p213 = scmp.ne.s32.totalorder %s205, %s208
      %p214 = scmp.eq.s32.totalorder %s24, 0
      %p215 = por %p213, %p214
      %p216 = scmp.ne.s32.totalorder %s205, %s208
      %p217 = scmp.eq.s32.totalorder %s29, 1
      %p218 = por %p216, %p217
      %p219 = scmp.ne.s32.totalorder %s208, %s209
      %p220 = scmp.eq.s32.totalorder %s29, 0
      %p221 = por %p219, %p220
      %p222 = scmp.ne.s32.totalorder %s208, %s209
      %p223 = scmp.eq.s32.totalorder %s30, 1
      %p224 = por %p222, %p223
      %p226 = scmp.ne.s32.totalorder %s209, %s225
      %p227 = scmp.eq.s32.totalorder %s30, 0
      %p228 = por %p226, %p227
      %p229 = scmp.le.s32.totalorder 1, %s24
      %p230 = scmp.lt.s32.totalorder %s24, 3
      %p231 = pnand %p229, %p230
      %p232 = pneg %p231
      // Predicated region
      $region9: #{tpu_custom_call.1} parent=5 // pred_check
        _
      $region10: #{tpu_custom_call.1} parent=5 // pred_check_branch
        %234 = sbr.rel (%p231) target = $region12
      $region11: #{tpu_custom_call.1} parent=5 // pred_region
        %s235 = ssub.s32 %s24, 1
        // Predicated region
        $region13: #{tpu_custom_call.1} parent=11 // pred_check
          %p236 = pneg %p111
        $region14: #{tpu_custom_call.1} parent=11 // pred_check_branch
          %238 = sbr.rel (%p236) target = $region16
        $region15: #{tpu_custom_call.1} parent=11 // pred_region
          %s240 = ssub.s32 1024, 1024
          %241 = vsyncadd [#allocation10], %s240
          %s242 = sshll.u32 [#allocation11], 4
          %s243 = int_to_ptr.vmem [resolvable:$true] %s242
          %248 = dma.hbm_to_vmem [thread:$0]  %s2, 1024, %s243, [#allocation10], 64, 64, 4
        $region16: #{tpu_custom_call.1} parent=11 // pred_fallthru
          _
        // Predicated region
        $region17: #{tpu_custom_call.1} parent=11 // pred_check
          %p249 = pneg %p132
        $region18: #{tpu_custom_call.1} parent=11 // pred_check_branch
          %251 = sbr.rel (%p249) target = $region20
        $region19: #{tpu_custom_call.1} parent=11 // pred_region
          %s253 = ssub.s32 1024, 1024
          %254 = vsyncadd [#allocation13], %s253
          %s255 = sshll.u32 [#allocation12], 4
          %s256 = int_to_ptr.vmem [resolvable:$true] %s255
          %261 = dma.hbm_to_vmem [thread:$0]  %s3, 1024, %s256, [#allocation13], 64, 64, 4
        $region20: #{tpu_custom_call.1} parent=11 // pred_fallthru
          _
        // Predicated region
        $region21: #{tpu_custom_call.1} parent=11 // pred_check
          %p262 = pneg %p153
        $region22: #{tpu_custom_call.1} parent=11 // pred_check_branch
          %264 = sbr.rel (%p262) target = $region24
        $region23: #{tpu_custom_call.1} parent=11 // pred_region
          _
        $region24: #{tpu_custom_call.1} parent=11 // pred_fallthru
          _
        // Predicated region
        $region25: #{tpu_custom_call.1} parent=11 // pred_check
          %p265 = pneg %p174
        $region26: #{tpu_custom_call.1} parent=11 // pred_check_branch
          %267 = sbr.rel (%p265) target = $region28
        $region27: #{tpu_custom_call.1} parent=11 // pred_region
          %s269 = ssub.s32 1024, 1024
          %270 = vsyncadd [#allocation13], %s269
          %s271 = sshll.u32 [#allocation14], 4
          %s272 = int_to_ptr.vmem [resolvable:$true] %s271
          %277 = dma.hbm_to_vmem [thread:$0]  %s5, 1024, %s272, [#allocation13], 64, 64, 4
        $region28: #{tpu_custom_call.1} parent=11 // pred_fallthru
          _
        // Predicated region
        $region29: #{tpu_custom_call.1} parent=11 // pred_check
          %p278 = pneg %p195
        $region30: #{tpu_custom_call.1} parent=11 // pred_check_branch
          %280 = sbr.rel (%p278) target = $region32
        $region31: #{tpu_custom_call.1} parent=11 // pred_region
          _
        $region32: #{tpu_custom_call.1} parent=11 // pred_fallthru
          _
      $region12: #{tpu_custom_call.1} parent=5 // pred_fallthru
        _
      %p281 = scmp.lt.s32.totalorder %s24, 2
      // Predicated region
      $region33: #{tpu_custom_call.1} parent=5 // pred_check
        %p282 = pneg %p281
      $region34: #{tpu_custom_call.1} parent=5 // pred_check_branch
        %284 = sbr.rel (%p282) target = $region36
      $region35: #{tpu_custom_call.1} parent=5 // pred_region
        // Predicated region
        $region37: #{tpu_custom_call.1} parent=35 // pred_check
          %p285 = pneg %p56
        $region38: #{tpu_custom_call.1} parent=35 // pred_check_branch
          %287 = sbr.rel (%p285) target = $region40
        $region39: #{tpu_custom_call.1} parent=35 // pred_region
          %s288 = sand.u32 %s46, 1
          %s289 = scalar_lea.sflag [#allocation7], %s288
          %s290 = sand.u32 %s46, 1
          %s291 = smul.addr %s290, 64
          %s292 = scalar_lea.vmem [#allocation6], %s291
          %s294 = ssub.s32 1024, 1024
          %295 = vsyncadd %s289, %s294
          %s296 = smul.addr %s31, 16
          %s297 = smul.addr %s296, 64
          %s298 = scalar_lea.hbm %s0, %s297
          %s299 = sshll.u32 %s292, 4
          %s300 = int_to_ptr.vmem [resolvable:$true] %s299
          %305 = dma.hbm_to_vmem [thread:$0]  %s298, 1024, %s300, %s289, 64, 64, 4
        $region40: #{tpu_custom_call.1} parent=35 // pred_fallthru
          _
        // Predicated region
        $region41: #{tpu_custom_call.1} parent=35 // pred_check
          %p306 = pneg %p84
        $region42: #{tpu_custom_call.1} parent=35 // pred_check_branch
          %308 = sbr.rel (%p306) target = $region44
        $region43: #{tpu_custom_call.1} parent=35 // pred_region
          %s309 = sand.u32 %s24, 1
          %s310 = scalar_lea.sflag [#allocation10], %s309
          %s311 = sand.u32 %s74, 1
          %s312 = smul.addr %s311, 256
          %s313 = scalar_lea.vmem [#allocation9], %s312
          %s314 = smul.u32 4, %s32
          %s316 = ssub.s32 4096, 4096
          %317 = vsyncadd %s310, %s316
          %s318 = smul.addr %s314, 16
          %s319 = smul.addr %s31, 64
          %s320 = sadd.s32 %s318, %s319
          %s321 = smul.addr %s320, 64
          %s322 = scalar_lea.hbm %s1, %s321
          %s323 = sshll.u32 %s313, 4
          %s324 = int_to_ptr.vmem [resolvable:$true] %s323
          %329 = dma.hbm_to_vmem [thread:$0]  %s322, 4096, %s324, %s310, 64, 64, 4
        $region44: #{tpu_custom_call.1} parent=35 // pred_fallthru
          _
      $region36: #{tpu_custom_call.1} parent=5 // pred_fallthru
        _
      %p330 = scmp.le.s32.totalorder 1, %s24
      %p331 = scmp.lt.s32.totalorder %s24, 3
      %p332 = pnand %p330, %p331
      %p333 = pneg %p332
      // Predicated region
      $region45: #{tpu_custom_call.1} parent=5 // pred_check
        _
      $region46: #{tpu_custom_call.1} parent=5 // pred_check_branch
        %335 = sbr.rel (%p332) target = $region48
      $region47: #{tpu_custom_call.1} parent=5 // pred_region
        %s336 = ssub.s32 %s24, 1
        %s337 = sand.u32 %s49, 1
        %s338 = scalar_lea.sflag [#allocation7], %s337
        %s339 = sand.u32 %s49, 1
        %s340 = smul.addr %s339, 64
        %s341 = scalar_lea.vmem [#allocation6], %s340
        // Predicated region
        $region49: #{tpu_custom_call.1} parent=47 // pred_check
          %p342 = pneg %p62
        $region50: #{tpu_custom_call.1} parent=47 // pred_check_branch
          %344 = sbr.rel (%p342) target = $region52
        $region51: #{tpu_custom_call.1} parent=47 // pred_region
          %345 = dma.done %s338, 1024
        $region52: #{tpu_custom_call.1} parent=47 // pred_fallthru
          _
        %s346 = sand.u32 %s29, 1
        %s347 = scalar_lea.sflag [#allocation10], %s346
        %s348 = sand.u32 %s77, 1
        %s349 = smul.addr %s348, 256
        %s350 = scalar_lea.vmem [#allocation9], %s349
        // Predicated region
        $region53: #{tpu_custom_call.1} parent=47 // pred_check
          %p351 = pneg %p90
        $region54: #{tpu_custom_call.1} parent=47 // pred_check_branch
          %353 = sbr.rel (%p351) target = $region56
        $region55: #{tpu_custom_call.1} parent=47 // pred_region
          %354 = dma.done %s347, 4096
        $region56: #{tpu_custom_call.1} parent=47 // pred_fallthru
          _
        // Predicated region
        $region57: #{tpu_custom_call.1} parent=47 // pred_check
          %p355 = pneg %p111
        $region58: #{tpu_custom_call.1} parent=47 // pred_check_branch
          %357 = sbr.rel (%p355) target = $region60
        $region59: #{tpu_custom_call.1} parent=47 // pred_region
          %358 = dma.done [#allocation10], 1024
        $region60: #{tpu_custom_call.1} parent=47 // pred_fallthru
          _
        // Predicated region
        $region61: #{tpu_custom_call.1} parent=47 // pred_check
          %p359 = pneg %p132
        $region62: #{tpu_custom_call.1} parent=47 // pred_check_branch
          %361 = sbr.rel (%p359) target = $region64
        $region63: #{tpu_custom_call.1} parent=47 // pred_region
          %362 = dma.done [#allocation13], 1024
        $region64: #{tpu_custom_call.1} parent=47 // pred_fallthru
          _
        // Predicated region
        $region65: #{tpu_custom_call.1} parent=47 // pred_check
          %p363 = pneg %p174
        $region66: #{tpu_custom_call.1} parent=47 // pred_check_branch
          %365 = sbr.rel (%p363) target = $region68
        $region67: #{tpu_custom_call.1} parent=47 // pred_region
          %366 = dma.done [#allocation13], 1024
        $region68: #{tpu_custom_call.1} parent=47 // pred_fallthru
          _
        %s367 = sand.u32 %s49, 1
        %s368 = scalar_lea.sflag [#allocation7], %s367
        %s369 = sand.u32 %s49, 1
        %s370 = smul.addr %s369, 64
        %s371 = scalar_lea.vmem [#allocation6], %s370
        %p372 = pneg %p62
        %p373 = pneg %p59
        %s374 = sand.u32 %s29, 1
        %s375 = scalar_lea.sflag [#allocation10], %s374
        %s376 = sand.u32 %s77, 1
        %s377 = smul.addr %s376, 256
        %s378 = scalar_lea.vmem [#allocation9], %s377
        %p379 = pneg %p90
        %p380 = pneg %p87
        %p381 = pneg %p111
        %p382 = pneg %p108
        %p383 = pneg %p132
        %p384 = pneg %p129
        %p385 = pneg %p153
        %p386 = pneg %p150
        %p387 = pneg %p174
        %p388 = pneg %p171
        %p389 = pneg %p195
        %p390 = pneg %p192
        %p391 = pneg %p221
        %p392 = pneg %p218
        %s393 = sand.u32 %s208, 1
        %s394 = scalar_lea.sflag [#allocation8], %s393
        %s395 = sand.u32 %s208, 1
        %s396 = smul.addr %s395, 128
        %s397 = scalar_lea.vmem [#allocation15], %s396
        %s398 = smul.u32 4, %s34
        %p400 = scmp.eq.s32.totalorder %s34, 0
        // Predicated region
        $region69: #{tpu_custom_call.1} parent=47 // pred_check
          %p401 = pneg %p400
        $region70: #{tpu_custom_call.1} parent=47 // pred_check_branch
          %403 = sbr.rel (%p401) target = $region72
        $region71: #{tpu_custom_call.1} parent=47 // pred_region
          %404 = vst [vmem:[#allocation2] sm:$0xff] 0.0
          %405 = vst [vmem:[#allocation2 + $0x8] sm:$0xff] 0.0
          %406 = vst [vmem:[#allocation2 + $0x10] sm:$0xff] 0.0
          %407 = vst [vmem:[#allocation2 + $0x18] sm:$0xff] 0.0
          %408 = vst [vmem:[#allocation2 + $0x20] sm:$0xff] 0.0
          %409 = vst [vmem:[#allocation2 + $0x28] sm:$0xff] 0.0
          %410 = vst [vmem:[#allocation2 + $0x30] sm:$0xff] 0.0
          %411 = vst [vmem:[#allocation2 + $0x38] sm:$0xff] 0.0
          %412 = vst [vmem:[#allocation2 + $0x40] sm:$0xff] 0.0
          %413 = vst [vmem:[#allocation2 + $0x48] sm:$0xff] 0.0
          %414 = vst [vmem:[#allocation2 + $0x50] sm:$0xff] 0.0
          %415 = vst [vmem:[#allocation2 + $0x58] sm:$0xff] 0.0
          %416 = vst [vmem:[#allocation2 + $0x60] sm:$0xff] 0.0
          %417 = vst [vmem:[#allocation2 + $0x68] sm:$0xff] 0.0
          %418 = vst [vmem:[#allocation2 + $0x70] sm:$0xff] 0.0
          %419 = vst [vmem:[#allocation2 + $0x78] sm:$0xff] 0.0
        $region72: #{tpu_custom_call.1} parent=47 // pred_fallthru
          _
        %v420 = vld [vmem:[#allocation2] sm:$0xff]
        %v421 = vld [vmem:[#allocation2 + $0x8] sm:$0xff]
        %v422 = vld [vmem:[#allocation2 + $0x10] sm:$0xff]
        %v423 = vld [vmem:[#allocation2 + $0x18] sm:$0xff]
        %v424 = vld [vmem:[#allocation2 + $0x20] sm:$0xff]
        %v425 = vld [vmem:[#allocation2 + $0x28] sm:$0xff]
        %v426 = vld [vmem:[#allocation2 + $0x30] sm:$0xff]
        %v427 = vld [vmem:[#allocation2 + $0x38] sm:$0xff]
        %v428 = vld [vmem:[#allocation2 + $0x40] sm:$0xff]
        %v429 = vld [vmem:[#allocation2 + $0x48] sm:$0xff]
        %v430 = vld [vmem:[#allocation2 + $0x50] sm:$0xff]
        %v431 = vld [vmem:[#allocation2 + $0x58] sm:$0xff]
        %v432 = vld [vmem:[#allocation2 + $0x60] sm:$0xff]
        %v433 = vld [vmem:[#allocation2 + $0x68] sm:$0xff]
        %v434 = vld [vmem:[#allocation2 + $0x70] sm:$0xff]
        %v435 = vld [vmem:[#allocation2 + $0x78] sm:$0xff]
        %v436 = vld [vmem:[%s350] sm:$0xf]
        %v437 = vld [vmem:[%s350 + $0x4] sm:$0xf]
        %v438 = vld [vmem:[%s350 + $0x8] sm:$0xf]
        %v439 = vld [vmem:[%s350 + $0xc] sm:$0xf]
        %v440 = vld [vmem:[%s350 + $0x10] sm:$0xf]
        %v441 = vld [vmem:[%s350 + $0x14] sm:$0xf]
        %v442 = vld [vmem:[%s350 + $0x18] sm:$0xf]
        %v443 = vld [vmem:[%s350 + $0x1c] sm:$0xf]
        %v444 = vld [vmem:[%s350 + $0x20] sm:$0xf]
        %v445 = vld [vmem:[%s350 + $0x24] sm:$0xf]
        %v446 = vld [vmem:[%s350 + $0x28] sm:$0xf]
        %v447 = vld [vmem:[%s350 + $0x2c] sm:$0xf]
        %v448 = vld [vmem:[%s350 + $0x30] sm:$0xf]
        %v449 = vld [vmem:[%s350 + $0x34] sm:$0xf]
        %v450 = vld [vmem:[%s350 + $0x38] sm:$0xf]
        %v451 = vld [vmem:[%s350 + $0x3c] sm:$0xf]
        %v452 = vunpack.c.l.bf16 %v436
        %v453 = vunpack.c.l.bf16 %v437
        %v454 = vunpack.c.l.bf16 %v438
        %v455 = vunpack.c.l.bf16 %v439
        %v456 = vunpack.c.l.bf16 %v440
        %v457 = vunpack.c.l.bf16 %v441
        %v458 = vunpack.c.l.bf16 %v442
        %v459 = vunpack.c.l.bf16 %v443
        %v460 = vunpack.c.l.bf16 %v444
        %v461 = vunpack.c.l.bf16 %v445
        %v462 = vunpack.c.l.bf16 %v446
        %v463 = vunpack.c.l.bf16 %v447
        %v464 = vunpack.c.l.bf16 %v448
        %v465 = vunpack.c.l.bf16 %v449
        %v466 = vunpack.c.l.bf16 %v450
        %v467 = vunpack.c.l.bf16 %v451
        %v468 = vadd.f32 %v420, %v452
        %v469 = vadd.f32 %v421, %v453
        %v470 = vadd.f32 %v422, %v454
        %v471 = vadd.f32 %v423, %v455
        %v472 = vadd.f32 %v424, %v456
        %v473 = vadd.f32 %v425, %v457
        %v474 = vadd.f32 %v426, %v458
        %v475 = vadd.f32 %v427, %v459
        %v476 = vadd.f32 %v428, %v460
        %v477 = vadd.f32 %v429, %v461
        %v478 = vadd.f32 %v430, %v462
        %v479 = vadd.f32 %v431, %v463
        %v480 = vadd.f32 %v432, %v464
        %v481 = vadd.f32 %v433, %v465
        %v482 = vadd.f32 %v434, %v466
        %v483 = vadd.f32 %v435, %v467
        %s484 = scalar_lea.vmem %s350, 64 [#allocation9]
        %v485 = vld [vmem:[%s484] sm:$0xf]
        %v486 = vld [vmem:[%s484 + $0x4] sm:$0xf]
        %v487 = vld [vmem:[%s484 + $0x8] sm:$0xf]
        %v488 = vld [vmem:[%s484 + $0xc] sm:$0xf]
        %v489 = vld [vmem:[%s484 + $0x10] sm:$0xf]
        %v490 = vld [vmem:[%s484 + $0x14] sm:$0xf]
        %v491 = vld [vmem:[%s484 + $0x18] sm:$0xf]
        %v492 = vld [vmem:[%s484 + $0x1c] sm:$0xf]
        %v493 = vld [vmem:[%s484 + $0x20] sm:$0xf]
        %v494 = vld [vmem:[%s484 + $0x24] sm:$0xf]
        %v495 = vld [vmem:[%s484 + $0x28] sm:$0xf]
        %v496 = vld [vmem:[%s484 + $0x2c] sm:$0xf]
        %v497 = vld [vmem:[%s484 + $0x30] sm:$0xf]
        %v498 = vld [vmem:[%s484 + $0x34] sm:$0xf]
        %v499 = vld [vmem:[%s484 + $0x38] sm:$0xf]
        %v500 = vld [vmem:[%s484 + $0x3c] sm:$0xf]
        %v501 = vunpack.c.l.bf16 %v485
        %v502 = vunpack.c.l.bf16 %v486
        %v503 = vunpack.c.l.bf16 %v487
        %v504 = vunpack.c.l.bf16 %v488
        %v505 = vunpack.c.l.bf16 %v489
        %v506 = vunpack.c.l.bf16 %v490
        %v507 = vunpack.c.l.bf16 %v491
        %v508 = vunpack.c.l.bf16 %v492
        %v509 = vunpack.c.l.bf16 %v493
        %v510 = vunpack.c.l.bf16 %v494
        %v511 = vunpack.c.l.bf16 %v495
        %v512 = vunpack.c.l.bf16 %v496
        %v513 = vunpack.c.l.bf16 %v497
        %v514 = vunpack.c.l.bf16 %v498
        %v515 = vunpack.c.l.bf16 %v499
        %v516 = vunpack.c.l.bf16 %v500
        %v517 = vadd.f32 %v468, %v501
        %v518 = vadd.f32 %v469, %v502
        %v519 = vadd.f32 %v470, %v503
        %v520 = vadd.f32 %v471, %v504
        %v521 = vadd.f32 %v472, %v505
        %v522 = vadd.f32 %v473, %v506
        %v523 = vadd.f32 %v474, %v507
        %v524 = vadd.f32 %v475, %v508
        %v525 = vadd.f32 %v476, %v509
        %v526 = vadd.f32 %v477, %v510
        %v527 = vadd.f32 %v478, %v511
        %v528 = vadd.f32 %v479, %v512
        %v529 = vadd.f32 %v480, %v513
        %v530 = vadd.f32 %v481, %v514
        %v531 = vadd.f32 %v482, %v515
        %v532 = vadd.f32 %v483, %v516
        %s533 = scalar_lea.vmem %s350, 128 [#allocation9]
        %v534 = vld [vmem:[%s533] sm:$0xf]
        %v535 = vld [vmem:[%s533 + $0x4] sm:$0xf]
        %v536 = vld [vmem:[%s533 + $0x8] sm:$0xf]
        %v537 = vld [vmem:[%s533 + $0xc] sm:$0xf]
        %v538 = vld [vmem:[%s533 + $0x10] sm:$0xf]
        %v539 = vld [vmem:[%s533 + $0x14] sm:$0xf]
        %v540 = vld [vmem:[%s533 + $0x18] sm:$0xf]
        %v541 = vld [vmem:[%s533 + $0x1c] sm:$0xf]
        %v542 = vld [vmem:[%s533 + $0x20] sm:$0xf]
        %v543 = vld [vmem:[%s533 + $0x24] sm:$0xf]
        %v544 = vld [vmem:[%s533 + $0x28] sm:$0xf]
        %v545 = vld [vmem:[%s533 + $0x2c] sm:$0xf]
        %v546 = vld [vmem:[%s533 + $0x30] sm:$0xf]
        %v547 = vld [vmem:[%s533 + $0x34] sm:$0xf]
        %v548 = vld [vmem:[%s533 + $0x38] sm:$0xf]
        %v549 = vld [vmem:[%s533 + $0x3c] sm:$0xf]
        %v550 = vunpack.c.l.bf16 %v534
        %v551 = vunpack.c.l.bf16 %v535
        %v552 = vunpack.c.l.bf16 %v536
        %v553 = vunpack.c.l.bf16 %v537
        %v554 = vunpack.c.l.bf16 %v538
        %v555 = vunpack.c.l.bf16 %v539
        %v556 = vunpack.c.l.bf16 %v540
        %v557 = vunpack.c.l.bf16 %v541
        %v558 = vunpack.c.l.bf16 %v542
        %v559 = vunpack.c.l.bf16 %v543
        %v560 = vunpack.c.l.bf16 %v544
        %v561 = vunpack.c.l.bf16 %v545
        %v562 = vunpack.c.l.bf16 %v546
        %v563 = vunpack.c.l.bf16 %v547
        %v564 = vunpack.c.l.bf16 %v548
        %v565 = vunpack.c.l.bf16 %v549
        %v566 = vadd.f32 %v517, %v550
        %v567 = vadd.f32 %v518, %v551
        %v568 = vadd.f32 %v519, %v552
        %v569 = vadd.f32 %v520, %v553
        %v570 = vadd.f32 %v521, %v554
        %v571 = vadd.f32 %v522, %v555
        %v572 = vadd.f32 %v523, %v556
        %v573 = vadd.f32 %v524, %v557
        %v574 = vadd.f32 %v525, %v558
        %v575 = vadd.f32 %v526, %v559
        %v576 = vadd.f32 %v527, %v560
        %v577 = vadd.f32 %v528, %v561
        %v578 = vadd.f32 %v529, %v562
        %v579 = vadd.f32 %v530, %v563
        %v580 = vadd.f32 %v531, %v564
        %v581 = vadd.f32 %v532, %v565
        %s582 = scalar_lea.vmem %s350, 192 [#allocation9]
        %v583 = vld [vmem:[%s582] sm:$0xf]
        %v584 = vld [vmem:[%s582 + $0x4] sm:$0xf]
        %v585 = vld [vmem:[%s582 + $0x8] sm:$0xf]
        %v586 = vld [vmem:[%s582 + $0xc] sm:$0xf]
        %v587 = vld [vmem:[%s582 + $0x10] sm:$0xf]
        %v588 = vld [vmem:[%s582 + $0x14] sm:$0xf]
        %v589 = vld [vmem:[%s582 + $0x18] sm:$0xf]
        %v590 = vld [vmem:[%s582 + $0x1c] sm:$0xf]
        %v591 = vld [vmem:[%s582 + $0x20] sm:$0xf]
        %v592 = vld [vmem:[%s582 + $0x24] sm:$0xf]
        %v593 = vld [vmem:[%s582 + $0x28] sm:$0xf]
        %v594 = vld [vmem:[%s582 + $0x2c] sm:$0xf]
        %v595 = vld [vmem:[%s582 + $0x30] sm:$0xf]
        %v596 = vld [vmem:[%s582 + $0x34] sm:$0xf]
        %v597 = vld [vmem:[%s582 + $0x38] sm:$0xf]
        %v598 = vld [vmem:[%s582 + $0x3c] sm:$0xf]
        %v599 = vunpack.c.l.bf16 %v583
        %v600 = vunpack.c.l.bf16 %v584
        %v601 = vunpack.c.l.bf16 %v585
        %v602 = vunpack.c.l.bf16 %v586
        %v603 = vunpack.c.l.bf16 %v587
        %v604 = vunpack.c.l.bf16 %v588
        %v605 = vunpack.c.l.bf16 %v589
        %v606 = vunpack.c.l.bf16 %v590
        %v607 = vunpack.c.l.bf16 %v591
        %v608 = vunpack.c.l.bf16 %v592
        %v609 = vunpack.c.l.bf16 %v593
        %v610 = vunpack.c.l.bf16 %v594
        %v611 = vunpack.c.l.bf16 %v595
        %v612 = vunpack.c.l.bf16 %v596
        %v613 = vunpack.c.l.bf16 %v597
        %v614 = vunpack.c.l.bf16 %v598
        %v615 = vadd.f32 %v566, %v599
        %v616 = vadd.f32 %v567, %v600
        %v617 = vadd.f32 %v568, %v601
        %v618 = vadd.f32 %v569, %v602
        %v619 = vadd.f32 %v570, %v603
        %v620 = vadd.f32 %v571, %v604
        %v621 = vadd.f32 %v572, %v605
        %v622 = vadd.f32 %v573, %v606
        %v623 = vadd.f32 %v574, %v607
        %v624 = vadd.f32 %v575, %v608
        %v625 = vadd.f32 %v576, %v609
        %v626 = vadd.f32 %v577, %v610
        %v627 = vadd.f32 %v578, %v611
        %v628 = vadd.f32 %v579, %v612
        %v629 = vadd.f32 %v580, %v613
        %v630 = vadd.f32 %v581, %v614
        %631 = vst [vmem:[#allocation2] sm:$0xff] %v615
        %632 = vst [vmem:[#allocation2 + $0x8] sm:$0xff] %v616
        %633 = vst [vmem:[#allocation2 + $0x10] sm:$0xff] %v617
        %634 = vst [vmem:[#allocation2 + $0x18] sm:$0xff] %v618
        %635 = vst [vmem:[#allocation2 + $0x20] sm:$0xff] %v619
        %636 = vst [vmem:[#allocation2 + $0x28] sm:$0xff] %v620
        %637 = vst [vmem:[#allocation2 + $0x30] sm:$0xff] %v621
        %638 = vst [vmem:[#allocation2 + $0x38] sm:$0xff] %v622
        %639 = vst [vmem:[#allocation2 + $0x40] sm:$0xff] %v623
        %640 = vst [vmem:[#allocation2 + $0x48] sm:$0xff] %v624
        %641 = vst [vmem:[#allocation2 + $0x50] sm:$0xff] %v625
        %642 = vst [vmem:[#allocation2 + $0x58] sm:$0xff] %v626
        %643 = vst [vmem:[#allocation2 + $0x60] sm:$0xff] %v627
        %644 = vst [vmem:[#allocation2 + $0x68] sm:$0xff] %v628
        %645 = vst [vmem:[#allocation2 + $0x70] sm:$0xff] %v629
        %646 = vst [vmem:[#allocation2 + $0x78] sm:$0xff] %v630
        // Predicated region
        $region73: #{tpu_custom_call.1} parent=47 // pred_check
          %p647 = pneg %p400
        $region74: #{tpu_custom_call.1} parent=47 // pred_check_branch
          %649 = sbr.rel (%p647) target = $region76
        $region75: #{tpu_custom_call.1} parent=47 // pred_region
          %v650 = vld [vmem:[%s341] sm:$0xf]
          %v651 = vld [vmem:[%s341 + $0x4] sm:$0xf]
          %v652 = vld [vmem:[%s341 + $0x8] sm:$0xf]
          %v653 = vld [vmem:[%s341 + $0xc] sm:$0xf]
          %v654 = vld [vmem:[%s341 + $0x10] sm:$0xf]
          %v655 = vld [vmem:[%s341 + $0x14] sm:$0xf]
          %v656 = vld [vmem:[%s341 + $0x18] sm:$0xf]
          %v657 = vld [vmem:[%s341 + $0x1c] sm:$0xf]
          %v658 = vld [vmem:[%s341 + $0x20] sm:$0xf]
          %v659 = vld [vmem:[%s341 + $0x24] sm:$0xf]
          %v660 = vld [vmem:[%s341 + $0x28] sm:$0xf]
          %v661 = vld [vmem:[%s341 + $0x2c] sm:$0xf]
          %v662 = vld [vmem:[%s341 + $0x30] sm:$0xf]
          %v663 = vld [vmem:[%s341 + $0x34] sm:$0xf]
          %v664 = vld [vmem:[%s341 + $0x38] sm:$0xf]
          %v665 = vld [vmem:[%s341 + $0x3c] sm:$0xf]
          %v666 = vld [vmem:[#allocation2] sm:$0xff]
          %v667 = vld [vmem:[#allocation2 + $0x8] sm:$0xff]
          %v668 = vld [vmem:[#allocation2 + $0x10] sm:$0xff]
          %v669 = vld [vmem:[#allocation2 + $0x18] sm:$0xff]
          %v670 = vld [vmem:[#allocation2 + $0x20] sm:$0xff]
          %v671 = vld [vmem:[#allocation2 + $0x28] sm:$0xff]
          %v672 = vld [vmem:[#allocation2 + $0x30] sm:$0xff]
          %v673 = vld [vmem:[#allocation2 + $0x38] sm:$0xff]
          %v674 = vld [vmem:[#allocation2 + $0x40] sm:$0xff]
          %v675 = vld [vmem:[#allocation2 + $0x48] sm:$0xff]
          %v676 = vld [vmem:[#allocation2 + $0x50] sm:$0xff]
          %v677 = vld [vmem:[#allocation2 + $0x58] sm:$0xff]
          %v678 = vld [vmem:[#allocation2 + $0x60] sm:$0xff]
          %v679 = vld [vmem:[#allocation2 + $0x68] sm:$0xff]
          %v680 = vld [vmem:[#allocation2 + $0x70] sm:$0xff]
          %v681 = vld [vmem:[#allocation2 + $0x78] sm:$0xff]
          %v682 = vmul.f32 %v666, 0.25
          %v683 = vmul.f32 %v667, 0.25
          %v684 = vmul.f32 %v668, 0.25
          %v685 = vmul.f32 %v669, 0.25
          %v686 = vmul.f32 %v670, 0.25
          %v687 = vmul.f32 %v671, 0.25
          %v688 = vmul.f32 %v672, 0.25
          %v689 = vmul.f32 %v673, 0.25
          %v690 = vmul.f32 %v674, 0.25
          %v691 = vmul.f32 %v675, 0.25
          %v692 = vmul.f32 %v676, 0.25
          %v693 = vmul.f32 %v677, 0.25
          %v694 = vmul.f32 %v678, 0.25
          %v695 = vmul.f32 %v679, 0.25
          %v696 = vmul.f32 %v680, 0.25
          %v697 = vmul.f32 %v681, 0.25
          %v698 = vpack.c.bf16 %v683, %v682
          %v699 = vpack.c.bf16 %v685, %v684
          %v700 = vpack.c.bf16 %v687, %v686
          %v701 = vpack.c.bf16 %v689, %v688
          %v702 = vpack.c.bf16 %v691, %v690
          %v703 = vpack.c.bf16 %v693, %v692
          %v704 = vpack.c.bf16 %v695, %v694
          %v705 = vpack.c.bf16 %v697, %v696
          %v706 = vld [vmem:[#allocation11] sm:$0xf]
          %v707 = vld [vmem:[#allocation11 + $0x4] sm:$0xf]
          %v708 = vld [vmem:[#allocation11 + $0x8] sm:$0xf]
          %v709 = vld [vmem:[#allocation11 + $0xc] sm:$0xf]
          %v710 = vld [vmem:[#allocation11 + $0x10] sm:$0xf]
          %v711 = vld [vmem:[#allocation11 + $0x14] sm:$0xf]
          %v712 = vld [vmem:[#allocation11 + $0x18] sm:$0xf]
          %v713 = vld [vmem:[#allocation11 + $0x1c] sm:$0xf]
          %v714 = vld [vmem:[#allocation11 + $0x20] sm:$0xf]
          %v715 = vld [vmem:[#allocation11 + $0x24] sm:$0xf]
          %v716 = vld [vmem:[#allocation11 + $0x28] sm:$0xf]
          %v717 = vld [vmem:[#allocation11 + $0x2c] sm:$0xf]
          %v718 = vld [vmem:[#allocation11 + $0x30] sm:$0xf]
          %v719 = vld [vmem:[#allocation11 + $0x34] sm:$0xf]
          %v720 = vld [vmem:[#allocation11 + $0x38] sm:$0xf]
          %v721 = vld [vmem:[#allocation11 + $0x3c] sm:$0xf]
          %v722 = vld [vmem:[#allocation12] sm:$0xf]
          %v723 = vld [vmem:[#allocation12 + $0x4] sm:$0xf]
          %v724 = vld [vmem:[#allocation12 + $0x8] sm:$0xf]
          %v725 = vld [vmem:[#allocation12 + $0xc] sm:$0xf]
          %v726 = vld [vmem:[#allocation12 + $0x10] sm:$0xf]
          %v727 = vld [vmem:[#allocation12 + $0x14] sm:$0xf]
          %v728 = vld [vmem:[#allocation12 + $0x18] sm:$0xf]
          %v729 = vld [vmem:[#allocation12 + $0x1c] sm:$0xf]
          %v730 = vld [vmem:[#allocation12 + $0x20] sm:$0xf]
          %v731 = vld [vmem:[#allocation12 + $0x24] sm:$0xf]
          %v732 = vld [vmem:[#allocation12 + $0x28] sm:$0xf]
          %v733 = vld [vmem:[#allocation12 + $0x2c] sm:$0xf]
          %v734 = vld [vmem:[#allocation12 + $0x30] sm:$0xf]
          %v735 = vld [vmem:[#allocation12 + $0x34] sm:$0xf]
          %v736 = vld [vmem:[#allocation12 + $0x38] sm:$0xf]
          %v737 = vld [vmem:[#allocation12 + $0x3c] sm:$0xf]
          %v754 = vunpack.c.l.b16 %v722
          %v755 = vunpack.c.l.b16 %v723
          %v756 = vunpack.c.l.b16 %v724
          %v757 = vunpack.c.l.b16 %v725
          %v758 = vunpack.c.l.b16 %v726
          %v759 = vunpack.c.l.b16 %v727
          %v760 = vunpack.c.l.b16 %v728
          %v761 = vunpack.c.l.b16 %v729
          %v762 = vunpack.c.l.b16 %v730
          %v763 = vunpack.c.l.b16 %v731
          %v764 = vunpack.c.l.b16 %v732
          %v765 = vunpack.c.l.b16 %v733
          %v766 = vunpack.c.l.b16 %v734
          %v767 = vunpack.c.l.b16 %v735
          %v768 = vunpack.c.l.b16 %v736
          %v769 = vunpack.c.l.b16 %v737
          %v770 = vpack.c.b16 %v755, %v754
          %v771 = vpack.c.b16 %v757, %v756
          %v772 = vpack.c.b16 %v759, %v758
          %v773 = vpack.c.b16 %v761, %v760
          %v774 = vpack.c.b16 %v763, %v762
          %v775 = vpack.c.b16 %v765, %v764
          %v776 = vpack.c.b16 %v767, %v766
          %v777 = vpack.c.b16 %v769, %v768
          %786 = vmatprep.subr.bf16.mxu0 0
          %787 = vmatpush1.bf16.msra.mxu0 %v777
          %788 = vmatprep.subr.bf16.mxu0 0
          %789 = vmatpush1.bf16.msra.mxu0 %v776
          %790 = vmatprep.subr.bf16.mxu0 0
          %791 = vmatpush1.bf16.msra.mxu0 %v775
          %792 = vmatprep.subr.bf16.mxu0 0
          %793 = vmatpush1.bf16.msra.mxu0 %v774
          %794 = vmatprep.subr.bf16.mxu0 0
          %795 = vmatpush1.bf16.msra.mxu0 %v773
          %796 = vmatprep.subr.bf16.mxu0 0
          %797 = vmatpush1.bf16.msra.mxu0 %v772
          %798 = vmatprep.subr.bf16.mxu0 0
          %799 = vmatpush1.bf16.msra.mxu0 %v771
          %800 = vmatprep.subr.bf16.mxu0 0
          %801 = vmatpush1.bf16.msra.mxu0 %v770
          %802 = vmatprep.subr.bf16.mxu0 0
          %803 = vmatpush2.bf16.msra.mxu0 0
          %804 = vmatprep.subr.bf16.mxu0 0
          %805 = vmatpush2.bf16.msra.mxu0 0
          %806 = vmatprep.subr.bf16.mxu0 0
          %807 = vmatpush2.bf16.msra.mxu0 0
          %808 = vmatprep.subr.bf16.mxu0 0
          %809 = vmatpush2.bf16.msra.mxu0 0
          %810 = vmatprep.subr.bf16.mxu0 0
          %811 = vmatpush2.bf16.msra.mxu0 0
          %812 = vmatprep.subr.bf16.mxu0 0
          %813 = vmatpush2.bf16.msra.mxu0 0
          %814 = vmatprep.subr.bf16.mxu0 0
          %815 = vmatpush2.bf16.msra.mxu0 0
          %816 = vmatprep.subr.bf16.mxu0 0
          %817 = vmatpush2.bf16.msra.mxu0 0
          %818 = vmatprep.mubr.bf16.mxu0 0
          %819 = vmatmul.mubr.bf16.gmra.mxu0 %v698
          %v820 = vpop.f32.mrf.mxu0
          %v821 = vadd.f32 0.0, %v820
          %v822 = vpop.f32.mrf.mxu0
          %v823 = vpop.f32.mrf.mxu0
          %v824 = vadd.f32 0.0, %v823
          %v825 = vpop.f32.mrf.mxu0
          %826 = vmatprep.mubr.bf16.mxu0 0
          %827 = vmatmul.mubr.bf16.gmra.mxu0 %v699
          %v828 = vpop.f32.mrf.mxu0
          %v829 = vadd.f32 0.0, %v828
          %v830 = vpop.f32.mrf.mxu0
          %v831 = vpop.f32.mrf.mxu0
          %v832 = vadd.f32 0.0, %v831
          %v833 = vpop.f32.mrf.mxu0
          %834 = vmatprep.mubr.bf16.mxu0 0
          %835 = vmatmul.mubr.bf16.gmra.mxu0 %v700
          %v836 = vpop.f32.mrf.mxu0
          %v837 = vadd.f32 0.0, %v836
          %v838 = vpop.f32.mrf.mxu0
          %v839 = vpop.f32.mrf.mxu0
          %v840 = vadd.f32 0.0, %v839
          %v841 = vpop.f32.mrf.mxu0
          %842 = vmatprep.mubr.bf16.mxu0 0
          %843 = vmatmul.mubr.bf16.gmra.mxu0 %v701
          %v844 = vpop.f32.mrf.mxu0
          %v845 = vadd.f32 0.0, %v844
          %v846 = vpop.f32.mrf.mxu0
          %v847 = vpop.f32.mrf.mxu0
          %v848 = vadd.f32 0.0, %v847
          %v849 = vpop.f32.mrf.mxu0
          %850 = vmatprep.mubr.bf16.mxu0 0
          %851 = vmatmul.mubr.bf16.gmra.mxu0 %v702
          %v852 = vpop.f32.mrf.mxu0
          %v853 = vadd.f32 0.0, %v852
          %v854 = vpop.f32.mrf.mxu0
          %v855 = vpop.f32.mrf.mxu0
          %v856 = vadd.f32 0.0, %v855
          %v857 = vpop.f32.mrf.mxu0
          %858 = vmatprep.mubr.bf16.mxu0 0
          %859 = vmatmul.mubr.bf16.gmra.mxu0 %v703
          %v860 = vpop.f32.mrf.mxu0
          %v861 = vadd.f32 0.0, %v860
          %v862 = vpop.f32.mrf.mxu0
          %v863 = vpop.f32.mrf.mxu0
          %v864 = vadd.f32 0.0, %v863
          %v865 = vpop.f32.mrf.mxu0
          %866 = vmatprep.mubr.bf16.mxu0 0
          %867 = vmatmul.mubr.bf16.gmra.mxu0 %v704
          %v868 = vpop.f32.mrf.mxu0
          %v869 = vadd.f32 0.0, %v868
          %v870 = vpop.f32.mrf.mxu0
          %v871 = vpop.f32.mrf.mxu0
          %v872 = vadd.f32 0.0, %v871
          %v873 = vpop.f32.mrf.mxu0
          %874 = vmatprep.mubr.bf16.mxu0 0
          %875 = vmatmul.mubr.bf16.gmra.mxu0 %v705
          %v876 = vpop.f32.mrf.mxu0
          %v877 = vadd.f32 0.0, %v876
          %v878 = vpop.f32.mrf.mxu0
          %v879 = vpop.f32.mrf.mxu0
          %v880 = vadd.f32 0.0, %v879
          %v881 = vpop.f32.mrf.mxu0
          %882 = vdwg.mxu0
          %v899 = vunpack.c.l.b16 %v650
          %v900 = vunpack.c.l.b16 %v651
          %v901 = vunpack.c.l.b16 %v652
          %v902 = vunpack.c.l.b16 %v653
          %v903 = vunpack.c.l.b16 %v654
          %v904 = vunpack.c.l.b16 %v655
          %v905 = vunpack.c.l.b16 %v656
          %v906 = vunpack.c.l.b16 %v657
          %v907 = vunpack.c.l.b16 %v658
          %v908 = vunpack.c.l.b16 %v659
          %v909 = vunpack.c.l.b16 %v660
          %v910 = vunpack.c.l.b16 %v661
          %v911 = vunpack.c.l.b16 %v662
          %v912 = vunpack.c.l.b16 %v663
          %v913 = vunpack.c.l.b16 %v664
          %v914 = vunpack.c.l.b16 %v665
          %v915 = vpack.c.b16 %v900, %v899
          %v916 = vpack.c.b16 %v902, %v901
          %v917 = vpack.c.b16 %v904, %v903
          %v918 = vpack.c.b16 %v906, %v905
          %v919 = vpack.c.b16 %v908, %v907
          %v920 = vpack.c.b16 %v910, %v909
          %v921 = vpack.c.b16 %v912, %v911
          %v922 = vpack.c.b16 %v914, %v913
          %v947 = vunpack.c.l.b16 %v706
          %v948 = vunpack.c.l.b16 %v707
          %v949 = vunpack.c.l.b16 %v708
          %v950 = vunpack.c.l.b16 %v709
          %v951 = vunpack.c.l.b16 %v710
          %v952 = vunpack.c.l.b16 %v711
          %v953 = vunpack.c.l.b16 %v712
          %v954 = vunpack.c.l.b16 %v713
          %v955 = vunpack.c.l.b16 %v714
          %v956 = vunpack.c.l.b16 %v715
          %v957 = vunpack.c.l.b16 %v716
          %v958 = vunpack.c.l.b16 %v717
          %v959 = vunpack.c.l.b16 %v718
          %v960 = vunpack.c.l.b16 %v719
          %v961 = vunpack.c.l.b16 %v720
          %v962 = vunpack.c.l.b16 %v721
          %v963 = vpack.c.b16 %v948, %v947
          %v964 = vpack.c.b16 %v950, %v949
          %v965 = vpack.c.b16 %v952, %v951
          %v966 = vpack.c.b16 %v954, %v953
          %v967 = vpack.c.b16 %v956, %v955
          %v968 = vpack.c.b16 %v958, %v957
          %v969 = vpack.c.b16 %v960, %v959
          %v970 = vpack.c.b16 %v962, %v961
          %979 = vmatprep.subr.bf16.mxu0 0
          %980 = vmatpush1.bf16.msra.mxu0 %v970
          %981 = vmatprep.subr.bf16.mxu0 0
          %982 = vmatpush1.bf16.msra.mxu0 %v969
          %983 = vmatprep.subr.bf16.mxu0 0
          %984 = vmatpush1.bf16.msra.mxu0 %v968
          %985 = vmatprep.subr.bf16.mxu0 0
          %986 = vmatpush1.bf16.msra.mxu0 %v967
          %987 = vmatprep.subr.bf16.mxu0 0
          %988 = vmatpush1.bf16.msra.mxu0 %v966
          %989 = vmatprep.subr.bf16.mxu0 0
          %990 = vmatpush1.bf16.msra.mxu0 %v965
          %991 = vmatprep.subr.bf16.mxu0 0
          %992 = vmatpush1.bf16.msra.mxu0 %v964
          %993 = vmatprep.subr.bf16.mxu0 0
          %994 = vmatpush1.bf16.msra.mxu0 %v963
          %995 = vmatprep.subr.bf16.mxu0 0
          %996 = vmatpush2.bf16.msra.mxu0 0
          %997 = vmatprep.subr.bf16.mxu0 0
          %998 = vmatpush2.bf16.msra.mxu0 0
          %999 = vmatprep.subr.bf16.mxu0 0
          %1000 = vmatpush2.bf16.msra.mxu0 0
          %1001 = vmatprep.subr.bf16.mxu0 0
          %1002 = vmatpush2.bf16.msra.mxu0 0
          %1003 = vmatprep.subr.bf16.mxu0 0
          %1004 = vmatpush2.bf16.msra.mxu0 0
          %1005 = vmatprep.subr.bf16.mxu0 0
          %1006 = vmatpush2.bf16.msra.mxu0 0
          %1007 = vmatprep.subr.bf16.mxu0 0
          %1008 = vmatpush2.bf16.msra.mxu0 0
          %1009 = vmatprep.subr.bf16.mxu0 0
          %1010 = vmatpush2.bf16.msra.mxu0 0
          %1011 = vmatprep.mubr.bf16.mxu0 0
          %1012 = vmatmul.mubr.bf16.gmra.mxu0 %v915
          %v1013 = vpop.f32.mrf.mxu0
          %v1014 = vadd.f32 %v821, %v1013
          %v1015 = vpop.f32.mrf.mxu0
          %v1016 = vpop.f32.mrf.mxu0
          %v1017 = vadd.f32 %v824, %v1016
          %v1018 = vpop.f32.mrf.mxu0
          %1019 = vmatprep.mubr.bf16.mxu0 0
          %1020 = vmatmul.mubr.bf16.gmra.mxu0 %v916
          %v1021 = vpop.f32.mrf.mxu0
          %v1022 = vadd.f32 %v829, %v1021
          %v1023 = vpop.f32.mrf.mxu0
          %v1024 = vpop.f32.mrf.mxu0
          %v1025 = vadd.f32 %v832, %v1024
          %v1026 = vpop.f32.mrf.mxu0
          %1027 = vmatprep.mubr.bf16.mxu0 0
          %1028 = vmatmul.mubr.bf16.gmra.mxu0 %v917
          %v1029 = vpop.f32.mrf.mxu0
          %v1030 = vadd.f32 %v837, %v1029
          %v1031 = vpop.f32.mrf.mxu0
          %v1032 = vpop.f32.mrf.mxu0
          %v1033 = vadd.f32 %v840, %v1032
          %v1034 = vpop.f32.mrf.mxu0
          %1035 = vmatprep.mubr.bf16.mxu0 0
          %1036 = vmatmul.mubr.bf16.gmra.mxu0 %v918
          %v1037 = vpop.f32.mrf.mxu0
          %v1038 = vadd.f32 %v845, %v1037
          %v1039 = vpop.f32.mrf.mxu0
          %v1040 = vpop.f32.mrf.mxu0
          %v1041 = vadd.f32 %v848, %v1040
          %v1042 = vpop.f32.mrf.mxu0
          %1043 = vmatprep.mubr.bf16.mxu0 0
          %1044 = vmatmul.mubr.bf16.gmra.mxu0 %v919
          %v1045 = vpop.f32.mrf.mxu0
          %v1046 = vadd.f32 %v853, %v1045
          %v1047 = vpop.f32.mrf.mxu0
          %v1048 = vpop.f32.mrf.mxu0
          %v1049 = vadd.f32 %v856, %v1048
          %v1050 = vpop.f32.mrf.mxu0
          %1051 = vmatprep.mubr.bf16.mxu0 0
          %1052 = vmatmul.mubr.bf16.gmra.mxu0 %v920
          %v1053 = vpop.f32.mrf.mxu0
          %v1054 = vadd.f32 %v861, %v1053
          %v1055 = vpop.f32.mrf.mxu0
          %v1056 = vpop.f32.mrf.mxu0
          %v1057 = vadd.f32 %v864, %v1056
          %v1058 = vpop.f32.mrf.mxu0
          %1059 = vmatprep.mubr.bf16.mxu0 0
          %1060 = vmatmul.mubr.bf16.gmra.mxu0 %v921
          %v1061 = vpop.f32.mrf.mxu0
          %v1062 = vadd.f32 %v869, %v1061
          %v1063 = vpop.f32.mrf.mxu0
          %v1064 = vpop.f32.mrf.mxu0
          %v1065 = vadd.f32 %v872, %v1064
          %v1066 = vpop.f32.mrf.mxu0
          %1067 = vmatprep.mubr.bf16.mxu0 0
          %1068 = vmatmul.mubr.bf16.gmra.mxu0 %v922
          %v1069 = vpop.f32.mrf.mxu0
          %v1070 = vadd.f32 %v877, %v1069
          %v1071 = vpop.f32.mrf.mxu0
          %v1072 = vpop.f32.mrf.mxu0
          %v1073 = vadd.f32 %v880, %v1072
          %v1074 = vpop.f32.mrf.mxu0
          %1075 = vdwg.mxu0
          %v1076 = vld [vmem:[%s4] sm:$0x1]
          %v1078 = vlaneseq
          %v1079 = vshrl.u32 %v1078, 7
          %v1080 = vsub.s32 0, %v1079
          %v1081 = vrot.slane %v1076, %v1080
          %v1083 = vadd.f32 %v1014, %v1081
          %v1084 = vadd.f32 %v1017, %v1081
          %v1085 = vadd.f32 %v1022, %v1081
          %v1086 = vadd.f32 %v1025, %v1081
          %v1087 = vadd.f32 %v1030, %v1081
          %v1088 = vadd.f32 %v1033, %v1081
          %v1089 = vadd.f32 %v1038, %v1081
          %v1090 = vadd.f32 %v1041, %v1081
          %v1091 = vadd.f32 %v1046, %v1081
          %v1092 = vadd.f32 %v1049, %v1081
          %v1093 = vadd.f32 %v1054, %v1081
          %v1094 = vadd.f32 %v1057, %v1081
          %v1095 = vadd.f32 %v1062, %v1081
          %v1096 = vadd.f32 %v1065, %v1081
          %v1097 = vadd.f32 %v1070, %v1081
          %v1098 = vadd.f32 %v1073, %v1081
          %v1099 = vpack.c.bf16 %v1084, %v1083
          %v1100 = vpack.c.bf16 %v1086, %v1085
          %v1101 = vpack.c.bf16 %v1088, %v1087
          %v1102 = vpack.c.bf16 %v1090, %v1089
          %v1103 = vpack.c.bf16 %v1092, %v1091
          %v1104 = vpack.c.bf16 %v1094, %v1093
          %v1105 = vpack.c.bf16 %v1096, %v1095
          %v1106 = vpack.c.bf16 %v1098, %v1097
          %v1115 = vunpack.c.l.b16 %v1099
          %v1116 = vunpack.c.h.b16 %v1099
          %v1117 = vunpack.c.l.b16 %v1100
          %v1118 = vunpack.c.h.b16 %v1100
          %v1119 = vunpack.c.l.b16 %v1101
          %v1120 = vunpack.c.h.b16 %v1101
          %v1121 = vunpack.c.l.b16 %v1102
          %v1122 = vunpack.c.h.b16 %v1102
          %v1123 = vunpack.c.l.b16 %v1103
          %v1124 = vunpack.c.h.b16 %v1103
          %v1125 = vunpack.c.l.b16 %v1104
          %v1126 = vunpack.c.h.b16 %v1104
          %v1127 = vunpack.c.l.b16 %v1105
          %v1128 = vunpack.c.h.b16 %v1105
          %v1129 = vunpack.c.l.b16 %v1106
          %v1130 = vunpack.c.h.b16 %v1106
          %v1131 = vpack.c.b16 %v1115, %v1115
          %v1132 = vpack.c.b16 %v1116, %v1116
          %v1133 = vpack.c.b16 %v1117, %v1117
          %v1134 = vpack.c.b16 %v1118, %v1118
          %v1135 = vpack.c.b16 %v1119, %v1119
          %v1136 = vpack.c.b16 %v1120, %v1120
          %v1137 = vpack.c.b16 %v1121, %v1121
          %v1138 = vpack.c.b16 %v1122, %v1122
          %v1139 = vpack.c.b16 %v1123, %v1123
          %v1140 = vpack.c.b16 %v1124, %v1124
          %v1141 = vpack.c.b16 %v1125, %v1125
          %v1142 = vpack.c.b16 %v1126, %v1126
          %v1143 = vpack.c.b16 %v1127, %v1127
          %v1144 = vpack.c.b16 %v1128, %v1128
          %v1145 = vpack.c.b16 %v1129, %v1129
          %v1146 = vpack.c.b16 %v1130, %v1130
          %1163 = vst [vmem:[#allocation3] sm:$0xf] %v1131
          %1164 = vst [vmem:[#allocation3 + $0x4] sm:$0xf] %v1132
          %1165 = vst [vmem:[#allocation3 + $0x8] sm:$0xf] %v1133
          %1166 = vst [vmem:[#allocation3 + $0xc] sm:$0xf] %v1134
          %1167 = vst [vmem:[#allocation3 + $0x10] sm:$0xf] %v1135
          %1168 = vst [vmem:[#allocation3 + $0x14] sm:$0xf] %v1136
          %1169 = vst [vmem:[#allocation3 + $0x18] sm:$0xf] %v1137
          %1170 = vst [vmem:[#allocation3 + $0x1c] sm:$0xf] %v1138
          %1171 = vst [vmem:[#allocation3 + $0x20] sm:$0xf] %v1139
          %1172 = vst [vmem:[#allocation3 + $0x24] sm:$0xf] %v1140
          %1173 = vst [vmem:[#allocation3 + $0x28] sm:$0xf] %v1141
          %1174 = vst [vmem:[#allocation3 + $0x2c] sm:$0xf] %v1142
          %1175 = vst [vmem:[#allocation3 + $0x30] sm:$0xf] %v1143
          %1176 = vst [vmem:[#allocation3 + $0x34] sm:$0xf] %v1144
          %1177 = vst [vmem:[#allocation3 + $0x38] sm:$0xf] %v1145
          %1178 = vst [vmem:[#allocation3 + $0x3c] sm:$0xf] %v1146
          %1179 = vxpose.xlu0.b32.start [1/16] %v1083, 128
          %1180 = vxpose.xlu0.b32.cont [2/16] %v1084, 128
          %1181 = vxpose.xlu0.b32.cont [3/16] %v1085, 128
          %1182 = vxpose.xlu0.b32.cont [4/16] %v1086, 128
          %1183 = vxpose.xlu0.b32.cont [5/16] %v1087, 128
          %1184 = vxpose.xlu0.b32.cont [6/16] %v1088, 128
          %1185 = vxpose.xlu0.b32.cont [7/16] %v1089, 128
          %1186 = vxpose.xlu0.b32.cont [8/16] %v1090, 128
          %1187 = vxpose.xlu0.b32.cont [9/16] %v1091, 128
          %1188 = vxpose.xlu0.b32.cont [10/16] %v1092, 128
          %1189 = vxpose.xlu0.b32.cont [11/16] %v1093, 128
          %1190 = vxpose.xlu0.b32.cont [12/16] %v1094, 128
          %1191 = vxpose.xlu0.b32.cont [13/16] %v1095, 128
          %1192 = vxpose.xlu0.b32.cont [14/16] %v1096, 128
          %1193 = vxpose.xlu0.b32.cont [15/16] %v1097, 128
          %1194 = vxpose.xlu0.b32.end [16/16] %v1098, 128
          %v1195 = vpop.trf.xlu0
          %v1196 = vpop.trf.xlu0
          %v1197 = vpop.trf.xlu0
          %v1198 = vpop.trf.xlu0
          %v1199 = vpop.trf.xlu0
          %v1200 = vpop.trf.xlu0
          %v1201 = vpop.trf.xlu0
          %v1202 = vpop.trf.xlu0
          %v1203 = vpop.trf.xlu0
          %v1204 = vpop.trf.xlu0
          %v1205 = vpop.trf.xlu0
          %v1206 = vpop.trf.xlu0
          %v1207 = vpop.trf.xlu0
          %v1208 = vpop.trf.xlu0
          %v1209 = vpop.trf.xlu0
          %v1210 = vpop.trf.xlu0
          %v1211 = vpack.c.bf16 %v1196, %v1195
          %v1212 = vpack.c.bf16 %v1198, %v1197
          %v1213 = vpack.c.bf16 %v1200, %v1199
          %v1214 = vpack.c.bf16 %v1202, %v1201
          %v1215 = vpack.c.bf16 %v1204, %v1203
          %v1216 = vpack.c.bf16 %v1206, %v1205
          %v1217 = vpack.c.bf16 %v1208, %v1207
          %v1218 = vpack.c.bf16 %v1210, %v1209
          %v1227 = vunpack.c.l.b16 %v1211
          %v1228 = vunpack.c.h.b16 %v1211
          %v1229 = vunpack.c.l.b16 %v1212
          %v1230 = vunpack.c.h.b16 %v1212
          %v1231 = vunpack.c.l.b16 %v1213
          %v1232 = vunpack.c.h.b16 %v1213
          %v1233 = vunpack.c.l.b16 %v1214
          %v1234 = vunpack.c.h.b16 %v1214
          %v1235 = vunpack.c.l.b16 %v1215
          %v1236 = vunpack.c.h.b16 %v1215
          %v1237 = vunpack.c.l.b16 %v1216
          %v1238 = vunpack.c.h.b16 %v1216
          %v1239 = vunpack.c.l.b16 %v1217
          %v1240 = vunpack.c.h.b16 %v1217
          %v1241 = vunpack.c.l.b16 %v1218
          %v1242 = vunpack.c.h.b16 %v1218
          %v1243 = vpack.c.b16 %v1227, %v1227
          %v1244 = vpack.c.b16 %v1228, %v1228
          %v1245 = vpack.c.b16 %v1229, %v1229
          %v1246 = vpack.c.b16 %v1230, %v1230
          %v1247 = vpack.c.b16 %v1231, %v1231
          %v1248 = vpack.c.b16 %v1232, %v1232
          %v1249 = vpack.c.b16 %v1233, %v1233
          %v1250 = vpack.c.b16 %v1234, %v1234
          %v1251 = vpack.c.b16 %v1235, %v1235
          %v1252 = vpack.c.b16 %v1236, %v1236
          %v1253 = vpack.c.b16 %v1237, %v1237
          %v1254 = vpack.c.b16 %v1238, %v1238
          %v1255 = vpack.c.b16 %v1239, %v1239
          %v1256 = vpack.c.b16 %v1240, %v1240
          %v1257 = vpack.c.b16 %v1241, %v1241
          %v1258 = vpack.c.b16 %v1242, %v1242
          %1275 = vst [vmem:[#allocation4] sm:$0xf] %v1243
          %1276 = vst [vmem:[#allocation4 + $0x4] sm:$0xf] %v1244
          %1277 = vst [vmem:[#allocation4 + $0x8] sm:$0xf] %v1245
          %1278 = vst [vmem:[#allocation4 + $0xc] sm:$0xf] %v1246
          %1279 = vst [vmem:[#allocation4 + $0x10] sm:$0xf] %v1247
          %1280 = vst [vmem:[#allocation4 + $0x14] sm:$0xf] %v1248
          %1281 = vst [vmem:[#allocation4 + $0x18] sm:$0xf] %v1249
          %1282 = vst [vmem:[#allocation4 + $0x1c] sm:$0xf] %v1250
          %1283 = vst [vmem:[#allocation4 + $0x20] sm:$0xf] %v1251
          %1284 = vst [vmem:[#allocation4 + $0x24] sm:$0xf] %v1252
          %1285 = vst [vmem:[#allocation4 + $0x28] sm:$0xf] %v1253
          %1286 = vst [vmem:[#allocation4 + $0x2c] sm:$0xf] %v1254
          %1287 = vst [vmem:[#allocation4 + $0x30] sm:$0xf] %v1255
          %1288 = vst [vmem:[#allocation4 + $0x34] sm:$0xf] %v1256
          %1289 = vst [vmem:[#allocation4 + $0x38] sm:$0xf] %v1257
          %1290 = vst [vmem:[#allocation4 + $0x3c] sm:$0xf] %v1258
          %s1291 = sld [smem:[#allocation5]]
          %v1292 = vld [vmem:[#allocation3] sm:$0xf]
          %v1293 = vld [vmem:[#allocation3 + $0x4] sm:$0xf]
          %v1294 = vld [vmem:[#allocation3 + $0x8] sm:$0xf]
          %v1295 = vld [vmem:[#allocation3 + $0xc] sm:$0xf]
          %v1296 = vld [vmem:[#allocation3 + $0x10] sm:$0xf]
          %v1297 = vld [vmem:[#allocation3 + $0x14] sm:$0xf]
          %v1298 = vld [vmem:[#allocation3 + $0x18] sm:$0xf]
          %v1299 = vld [vmem:[#allocation3 + $0x1c] sm:$0xf]
          %v1300 = vld [vmem:[#allocation3 + $0x20] sm:$0xf]
          %v1301 = vld [vmem:[#allocation3 + $0x24] sm:$0xf]
          %v1302 = vld [vmem:[#allocation3 + $0x28] sm:$0xf]
          %v1303 = vld [vmem:[#allocation3 + $0x2c] sm:$0xf]
          %v1304 = vld [vmem:[#allocation3 + $0x30] sm:$0xf]
          %v1305 = vld [vmem:[#allocation3 + $0x34] sm:$0xf]
          %v1306 = vld [vmem:[#allocation3 + $0x38] sm:$0xf]
          %v1307 = vld [vmem:[#allocation3 + $0x3c] sm:$0xf]
          %v1308 = vld [vmem:[#allocation14] sm:$0xf]
          %v1309 = vld [vmem:[#allocation14 + $0x4] sm:$0xf]
          %v1310 = vld [vmem:[#allocation14 + $0x8] sm:$0xf]
          %v1311 = vld [vmem:[#allocation14 + $0xc] sm:$0xf]
          %v1312 = vld [vmem:[#allocation14 + $0x10] sm:$0xf]
          %v1313 = vld [vmem:[#allocation14 + $0x14] sm:$0xf]
          %v1314 = vld [vmem:[#allocation14 + $0x18] sm:$0xf]
          %v1315 = vld [vmem:[#allocation14 + $0x1c] sm:$0xf]
          %v1316 = vld [vmem:[#allocation14 + $0x20] sm:$0xf]
          %v1317 = vld [vmem:[#allocation14 + $0x24] sm:$0xf]
          %v1318 = vld [vmem:[#allocation14 + $0x28] sm:$0xf]
          %v1319 = vld [vmem:[#allocation14 + $0x2c] sm:$0xf]
          %v1320 = vld [vmem:[#allocation14 + $0x30] sm:$0xf]
          %v1321 = vld [vmem:[#allocation14 + $0x34] sm:$0xf]
          %v1322 = vld [vmem:[#allocation14 + $0x38] sm:$0xf]
          %v1323 = vld [vmem:[#allocation14 + $0x3c] sm:$0xf]
          %v1340 = vunpack.c.l.b16 %v1292
          %v1341 = vunpack.c.l.b16 %v1293
          %v1342 = vunpack.c.l.b16 %v1294
          %v1343 = vunpack.c.l.b16 %v1295
          %v1344 = vunpack.c.l.b16 %v1296
          %v1345 = vunpack.c.l.b16 %v1297
          %v1346 = vunpack.c.l.b16 %v1298
          %v1347 = vunpack.c.l.b16 %v1299
          %v1348 = vunpack.c.l.b16 %v1300
          %v1349 = vunpack.c.l.b16 %v1301
          %v1350 = vunpack.c.l.b16 %v1302
          %v1351 = vunpack.c.l.b16 %v1303
          %v1352 = vunpack.c.l.b16 %v1304
          %v1353 = vunpack.c.l.b16 %v1305
          %v1354 = vunpack.c.l.b16 %v1306
          %v1355 = vunpack.c.l.b16 %v1307
          %v1356 = vpack.c.b16 %v1341, %v1340
          %v1357 = vpack.c.b16 %v1343, %v1342
          %v1358 = vpack.c.b16 %v1345, %v1344
          %v1359 = vpack.c.b16 %v1347, %v1346
          %v1360 = vpack.c.b16 %v1349, %v1348
          %v1361 = vpack.c.b16 %v1351, %v1350
          %v1362 = vpack.c.b16 %v1353, %v1352
          %v1363 = vpack.c.b16 %v1355, %v1354
          %v1388 = vunpack.c.l.b16 %v1308
          %v1389 = vunpack.c.l.b16 %v1309
          %v1390 = vunpack.c.l.b16 %v1310
          %v1391 = vunpack.c.l.b16 %v1311
          %v1392 = vunpack.c.l.b16 %v1312
          %v1393 = vunpack.c.l.b16 %v1313
          %v1394 = vunpack.c.l.b16 %v1314
          %v1395 = vunpack.c.l.b16 %v1315
          %v1396 = vunpack.c.l.b16 %v1316
          %v1397 = vunpack.c.l.b16 %v1317
          %v1398 = vunpack.c.l.b16 %v1318
          %v1399 = vunpack.c.l.b16 %v1319
          %v1400 = vunpack.c.l.b16 %v1320
          %v1401 = vunpack.c.l.b16 %v1321
          %v1402 = vunpack.c.l.b16 %v1322
          %v1403 = vunpack.c.l.b16 %v1323
          %v1404 = vpack.c.b16 %v1389, %v1388
          %v1405 = vpack.c.b16 %v1391, %v1390
          %v1406 = vpack.c.b16 %v1393, %v1392
          %v1407 = vpack.c.b16 %v1395, %v1394
          %v1408 = vpack.c.b16 %v1397, %v1396
          %v1409 = vpack.c.b16 %v1399, %v1398
          %v1410 = vpack.c.b16 %v1401, %v1400
          %v1411 = vpack.c.b16 %v1403, %v1402
          %1420 = vmatprep.subr.bf16.mxu0 0
          %1421 = vmatpush1.bf16.msra.mxu0 %v1411
          %1422 = vmatprep.subr.bf16.mxu0 0
          %1423 = vmatpush1.bf16.msra.mxu0 %v1410
          %1424 = vmatprep.subr.bf16.mxu0 0
          %1425 = vmatpush1.bf16.msra.mxu0 %v1409
          %1426 = vmatprep.subr.bf16.mxu0 0
          %1427 = vmatpush1.bf16.msra.mxu0 %v1408
          %1428 = vmatprep.subr.bf16.mxu0 0
          %1429 = vmatpush1.bf16.msra.mxu0 %v1407
          %1430 = vmatprep.subr.bf16.mxu0 0
          %1431 = vmatpush1.bf16.msra.mxu0 %v1406
          %1432 = vmatprep.subr.bf16.mxu0 0
          %1433 = vmatpush1.bf16.msra.mxu0 %v1405
          %1434 = vmatprep.subr.bf16.mxu0 0
          %1435 = vmatpush1.bf16.msra.mxu0 %v1404
          %1436 = vmatprep.subr.bf16.mxu0 0
          %1437 = vmatpush2.bf16.msra.mxu0 0
          %1438 = vmatprep.subr.bf16.mxu0 0
          %1439 = vmatpush2.bf16.msra.mxu0 0
          %1440 = vmatprep.subr.bf16.mxu0 0
          %1441 = vmatpush2.bf16.msra.mxu0 0
          %1442 = vmatprep.subr.bf16.mxu0 0
          %1443 = vmatpush2.bf16.msra.mxu0 0
          %1444 = vmatprep.subr.bf16.mxu0 0
          %1445 = vmatpush2.bf16.msra.mxu0 0
          %1446 = vmatprep.subr.bf16.mxu0 0
          %1447 = vmatpush2.bf16.msra.mxu0 0
          %1448 = vmatprep.subr.bf16.mxu0 0
          %1449 = vmatpush2.bf16.msra.mxu0 0
          %1450 = vmatprep.subr.bf16.mxu0 0
          %1451 = vmatpush2.bf16.msra.mxu0 0
          %1452 = vmatprep.mubr.bf16.mxu0 0
          %1453 = vmatmul.mubr.bf16.gmra.mxu0 %v1356
          %v1454 = vpop.f32.mrf.mxu0
          %v1455 = vadd.f32 0.0, %v1454
          %v1456 = vpop.f32.mrf.mxu0
          %v1457 = vpop.f32.mrf.mxu0
          %v1458 = vadd.f32 0.0, %v1457
          %v1459 = vpop.f32.mrf.mxu0
          %1460 = vmatprep.mubr.bf16.mxu0 0
          %1461 = vmatmul.mubr.bf16.gmra.mxu0 %v1357
          %v1462 = vpop.f32.mrf.mxu0
          %v1463 = vadd.f32 0.0, %v1462
          %v1464 = vpop.f32.mrf.mxu0
          %v1465 = vpop.f32.mrf.mxu0
          %v1466 = vadd.f32 0.0, %v1465
          %v1467 = vpop.f32.mrf.mxu0
          %1468 = vmatprep.mubr.bf16.mxu0 0
          %1469 = vmatmul.mubr.bf16.gmra.mxu0 %v1358
          %v1470 = vpop.f32.mrf.mxu0
          %v1471 = vadd.f32 0.0, %v1470
          %v1472 = vpop.f32.mrf.mxu0
          %v1473 = vpop.f32.mrf.mxu0
          %v1474 = vadd.f32 0.0, %v1473
          %v1475 = vpop.f32.mrf.mxu0
          %1476 = vmatprep.mubr.bf16.mxu0 0
          %1477 = vmatmul.mubr.bf16.gmra.mxu0 %v1359
          %v1478 = vpop.f32.mrf.mxu0
          %v1479 = vadd.f32 0.0, %v1478
          %v1480 = vpop.f32.mrf.mxu0
          %v1481 = vpop.f32.mrf.mxu0
          %v1482 = vadd.f32 0.0, %v1481
          %v1483 = vpop.f32.mrf.mxu0
          %1484 = vmatprep.mubr.bf16.mxu0 0
          %1485 = vmatmul.mubr.bf16.gmra.mxu0 %v1360
          %v1486 = vpop.f32.mrf.mxu0
          %v1487 = vadd.f32 0.0, %v1486
          %v1488 = vpop.f32.mrf.mxu0
          %v1489 = vpop.f32.mrf.mxu0
          %v1490 = vadd.f32 0.0, %v1489
          %v1491 = vpop.f32.mrf.mxu0
          %1492 = vmatprep.mubr.bf16.mxu0 0
          %1493 = vmatmul.mubr.bf16.gmra.mxu0 %v1361
          %v1494 = vpop.f32.mrf.mxu0
          %v1495 = vadd.f32 0.0, %v1494
          %v1496 = vpop.f32.mrf.mxu0
          %v1497 = vpop.f32.mrf.mxu0
          %v1498 = vadd.f32 0.0, %v1497
          %v1499 = vpop.f32.mrf.mxu0
          %1500 = vmatprep.mubr.bf16.mxu0 0
          %1501 = vmatmul.mubr.bf16.gmra.mxu0 %v1362
          %v1502 = vpop.f32.mrf.mxu0
          %v1503 = vadd.f32 0.0, %v1502
          %v1504 = vpop.f32.mrf.mxu0
          %v1505 = vpop.f32.mrf.mxu0
          %v1506 = vadd.f32 0.0, %v1505
          %v1507 = vpop.f32.mrf.mxu0
          %1508 = vmatprep.mubr.bf16.mxu0 0
          %1509 = vmatmul.mubr.bf16.gmra.mxu0 %v1363
          %v1510 = vpop.f32.mrf.mxu0
          %v1511 = vadd.f32 0.0, %v1510
          %v1512 = vpop.f32.mrf.mxu0
          %v1513 = vpop.f32.mrf.mxu0
          %v1514 = vadd.f32 0.0, %v1513
          %v1515 = vpop.f32.mrf.mxu0
          %1516 = vdwg.mxu0
          %v1517 = vpack.c.bf16 %v1458, %v1455
          %v1518 = vpack.c.bf16 %v1466, %v1463
          %v1519 = vpack.c.bf16 %v1474, %v1471
          %v1520 = vpack.c.bf16 %v1482, %v1479
          %v1521 = vpack.c.bf16 %v1490, %v1487
          %v1522 = vpack.c.bf16 %v1498, %v1495
          %v1523 = vpack.c.bf16 %v1506, %v1503
          %v1524 = vpack.c.bf16 %v1514, %v1511
          %v1525 = vld [vmem:[#allocation4] sm:$0xf]
          %v1526 = vld [vmem:[#allocation4 + $0x4] sm:$0xf]
          %v1527 = vld [vmem:[#allocation4 + $0x8] sm:$0xf]
          %v1528 = vld [vmem:[#allocation4 + $0xc] sm:$0xf]
          %v1529 = vld [vmem:[#allocation4 + $0x10] sm:$0xf]
          %v1530 = vld [vmem:[#allocation4 + $0x14] sm:$0xf]
          %v1531 = vld [vmem:[#allocation4 + $0x18] sm:$0xf]
          %v1532 = vld [vmem:[#allocation4 + $0x1c] sm:$0xf]
          %v1533 = vld [vmem:[#allocation4 + $0x20] sm:$0xf]
          %v1534 = vld [vmem:[#allocation4 + $0x24] sm:$0xf]
          %v1535 = vld [vmem:[#allocation4 + $0x28] sm:$0xf]
          %v1536 = vld [vmem:[#allocation4 + $0x2c] sm:$0xf]
          %v1537 = vld [vmem:[#allocation4 + $0x30] sm:$0xf]
          %v1538 = vld [vmem:[#allocation4 + $0x34] sm:$0xf]
          %v1539 = vld [vmem:[#allocation4 + $0x38] sm:$0xf]
          %v1540 = vld [vmem:[#allocation4 + $0x3c] sm:$0xf]
          %v1541 = vstv %s1291
          %v1558 = vunpack.c.l.b16 %v1525
          %v1559 = vunpack.c.l.b16 %v1526
          %v1560 = vunpack.c.l.b16 %v1527
          %v1561 = vunpack.c.l.b16 %v1528
          %v1562 = vunpack.c.l.b16 %v1529
          %v1563 = vunpack.c.l.b16 %v1530
          %v1564 = vunpack.c.l.b16 %v1531
          %v1565 = vunpack.c.l.b16 %v1532
          %v1566 = vunpack.c.l.b16 %v1533
          %v1567 = vunpack.c.l.b16 %v1534
          %v1568 = vunpack.c.l.b16 %v1535
          %v1569 = vunpack.c.l.b16 %v1536
          %v1570 = vunpack.c.l.b16 %v1537
          %v1571 = vunpack.c.l.b16 %v1538
          %v1572 = vunpack.c.l.b16 %v1539
          %v1573 = vunpack.c.l.b16 %v1540
          %v1574 = vpack.c.b16 %v1559, %v1558
          %v1575 = vpack.c.b16 %v1561, %v1560
          %v1576 = vpack.c.b16 %v1563, %v1562
          %v1577 = vpack.c.b16 %v1565, %v1564
          %v1578 = vpack.c.b16 %v1567, %v1566
          %v1579 = vpack.c.b16 %v1569, %v1568
          %v1580 = vpack.c.b16 %v1571, %v1570
          %v1581 = vpack.c.b16 %v1573, %v1572
          %1590 = vmatprep.subr.bf16.mxu0 0
          %1591 = vmatpush1.bf16.msra.mxu0 %v1581
          %1592 = vmatprep.subr.bf16.mxu0 0
          %1593 = vmatpush1.bf16.msra.mxu0 %v1580
          %1594 = vmatprep.subr.bf16.mxu0 0
          %1595 = vmatpush1.bf16.msra.mxu0 %v1579
          %1596 = vmatprep.subr.bf16.mxu0 0
          %1597 = vmatpush1.bf16.msra.mxu0 %v1578
          %1598 = vmatprep.subr.bf16.mxu0 0
          %1599 = vmatpush1.bf16.msra.mxu0 %v1577
          %1600 = vmatprep.subr.bf16.mxu0 0
          %1601 = vmatpush1.bf16.msra.mxu0 %v1576
          %1602 = vmatprep.subr.bf16.mxu0 0
          %1603 = vmatpush1.bf16.msra.mxu0 %v1575
          %1604 = vmatprep.subr.bf16.mxu0 0
          %1605 = vmatpush1.bf16.msra.mxu0 %v1574
          %1606 = vmatprep.subr.bf16.mxu0 0
          %1607 = vmatpush2.bf16.msra.mxu0 0
          %1608 = vmatprep.subr.bf16.mxu0 0
          %1609 = vmatpush2.bf16.msra.mxu0 0
          %1610 = vmatprep.subr.bf16.mxu0 0
          %1611 = vmatpush2.bf16.msra.mxu0 0
          %1612 = vmatprep.subr.bf16.mxu0 0
          %1613 = vmatpush2.bf16.msra.mxu0 0
          %1614 = vmatprep.subr.bf16.mxu0 0
          %1615 = vmatpush2.bf16.msra.mxu0 0
          %1616 = vmatprep.subr.bf16.mxu0 0
          %1617 = vmatpush2.bf16.msra.mxu0 0
          %1618 = vmatprep.subr.bf16.mxu0 0
          %1619 = vmatpush2.bf16.msra.mxu0 0
          %1620 = vmatprep.subr.bf16.mxu0 0
          %1621 = vmatpush2.bf16.msra.mxu0 0
          %1622 = vmatprep.mubr.bf16.mxu0 0
          %1623 = vmatmul.mubr.bf16.gmra.mxu0 %v1517
          %v1624 = vpop.f32.mrf.mxu0
          %v1625 = vadd.f32 %v1541, %v1624
          %v1626 = vpop.f32.mrf.mxu0
          %v1627 = vpop.f32.mrf.mxu0
          %v1628 = vadd.f32 %v1541, %v1627
          %v1629 = vpop.f32.mrf.mxu0
          %1630 = vmatprep.mubr.bf16.mxu0 0
          %1631 = vmatmul.mubr.bf16.gmra.mxu0 %v1518
          %v1632 = vpop.f32.mrf.mxu0
          %v1633 = vadd.f32 %v1541, %v1632
          %v1634 = vpop.f32.mrf.mxu0
          %v1635 = vpop.f32.mrf.mxu0
          %v1636 = vadd.f32 %v1541, %v1635
          %v1637 = vpop.f32.mrf.mxu0
          %1638 = vmatprep.mubr.bf16.mxu0 0
          %1639 = vmatmul.mubr.bf16.gmra.mxu0 %v1519
          %v1640 = vpop.f32.mrf.mxu0
          %v1641 = vadd.f32 %v1541, %v1640
          %v1642 = vpop.f32.mrf.mxu0
          %v1643 = vpop.f32.mrf.mxu0
          %v1644 = vadd.f32 %v1541, %v1643
          %v1645 = vpop.f32.mrf.mxu0
          %1646 = vmatprep.mubr.bf16.mxu0 0
          %1647 = vmatmul.mubr.bf16.gmra.mxu0 %v1520
          %v1648 = vpop.f32.mrf.mxu0
          %v1649 = vadd.f32 %v1541, %v1648
          %v1650 = vpop.f32.mrf.mxu0
          %v1651 = vpop.f32.mrf.mxu0
          %v1652 = vadd.f32 %v1541, %v1651
          %v1653 = vpop.f32.mrf.mxu0
          %1654 = vmatprep.mubr.bf16.mxu0 0
          %1655 = vmatmul.mubr.bf16.gmra.mxu0 %v1521
          %v1656 = vpop.f32.mrf.mxu0
          %v1657 = vadd.f32 %v1541, %v1656
          %v1658 = vpop.f32.mrf.mxu0
          %v1659 = vpop.f32.mrf.mxu0
          %v1660 = vadd.f32 %v1541, %v1659
          %v1661 = vpop.f32.mrf.mxu0
          %1662 = vmatprep.mubr.bf16.mxu0 0
          %1663 = vmatmul.mubr.bf16.gmra.mxu0 %v1522
          %v1664 = vpop.f32.mrf.mxu0
          %v1665 = vadd.f32 %v1541, %v1664
          %v1666 = vpop.f32.mrf.mxu0
          %v1667 = vpop.f32.mrf.mxu0
          %v1668 = vadd.f32 %v1541, %v1667
          %v1669 = vpop.f32.mrf.mxu0
          %1670 = vmatprep.mubr.bf16.mxu0 0
          %1671 = vmatmul.mubr.bf16.gmra.mxu0 %v1523
          %v1672 = vpop.f32.mrf.mxu0
          %v1673 = vadd.f32 %v1541, %v1672
          %v1674 = vpop.f32.mrf.mxu0
          %v1675 = vpop.f32.mrf.mxu0
          %v1676 = vadd.f32 %v1541, %v1675
          %v1677 = vpop.f32.mrf.mxu0
          %1678 = vmatprep.mubr.bf16.mxu0 0
          %1679 = vmatmul.mubr.bf16.gmra.mxu0 %v1524
          %v1680 = vpop.f32.mrf.mxu0
          %v1681 = vadd.f32 %v1541, %v1680
          %v1682 = vpop.f32.mrf.mxu0
          %v1683 = vpop.f32.mrf.mxu0
          %v1684 = vadd.f32 %v1541, %v1683
          %v1685 = vpop.f32.mrf.mxu0
          %1686 = vdwg.mxu0
          %v1687 = vxor.u32 %v1625, 2147483648
          %v1688 = vxor.u32 %v1628, 2147483648
          %v1689 = vxor.u32 %v1633, 2147483648
          %v1690 = vxor.u32 %v1636, 2147483648
          %v1691 = vxor.u32 %v1641, 2147483648
          %v1692 = vxor.u32 %v1644, 2147483648
          %v1693 = vxor.u32 %v1649, 2147483648
          %v1694 = vxor.u32 %v1652, 2147483648
          %v1695 = vxor.u32 %v1657, 2147483648
          %v1696 = vxor.u32 %v1660, 2147483648
          %v1697 = vxor.u32 %v1665, 2147483648
          %v1698 = vxor.u32 %v1668, 2147483648
          %v1699 = vxor.u32 %v1673, 2147483648
          %v1700 = vxor.u32 %v1676, 2147483648
          %v1701 = vxor.u32 %v1681, 2147483648
          %v1702 = vxor.u32 %v1684, 2147483648
          %v1703 = vmul.f32 %v1687, 1.442695
          %v1704 = vpow.pop %v1703
          %v1705 = vmul.f32 %v1688, 1.442695
          %v1706 = vpow.pop %v1705
          %v1707 = vmul.f32 %v1689, 1.442695
          %v1708 = vpow.pop %v1707
          %v1709 = vmul.f32 %v1690, 1.442695
          %v1710 = vpow.pop %v1709
          %v1711 = vmul.f32 %v1691, 1.442695
          %v1712 = vpow.pop %v1711
          %v1713 = vmul.f32 %v1692, 1.442695
          %v1714 = vpow.pop %v1713
          %v1715 = vmul.f32 %v1693, 1.442695
          %v1716 = vpow.pop %v1715
          %v1717 = vmul.f32 %v1694, 1.442695
          %v1718 = vpow.pop %v1717
          %v1719 = vmul.f32 %v1695, 1.442695
          %v1720 = vpow.pop %v1719
          %v1721 = vmul.f32 %v1696, 1.442695
          %v1722 = vpow.pop %v1721
          %v1723 = vmul.f32 %v1697, 1.442695
          %v1724 = vpow.pop %v1723
          %v1725 = vmul.f32 %v1698, 1.442695
          %v1726 = vpow.pop %v1725
          %v1727 = vmul.f32 %v1699, 1.442695
          %v1728 = vpow.pop %v1727
          %v1729 = vmul.f32 %v1700, 1.442695
          %v1730 = vpow.pop %v1729
          %v1731 = vmul.f32 %v1701, 1.442695
          %v1732 = vpow.pop %v1731
          %v1733 = vmul.f32 %v1702, 1.442695
          %v1734 = vpow.pop %v1733
          %v1735 = vadd.f32 %v1704, 1.0
          %v1736 = vadd.f32 %v1706, 1.0
          %v1737 = vadd.f32 %v1708, 1.0
          %v1738 = vadd.f32 %v1710, 1.0
          %v1739 = vadd.f32 %v1712, 1.0
          %v1740 = vadd.f32 %v1714, 1.0
          %v1741 = vadd.f32 %v1716, 1.0
          %v1742 = vadd.f32 %v1718, 1.0
          %v1743 = vadd.f32 %v1720, 1.0
          %v1744 = vadd.f32 %v1722, 1.0
          %v1745 = vadd.f32 %v1724, 1.0
          %v1746 = vadd.f32 %v1726, 1.0
          %v1747 = vadd.f32 %v1728, 1.0
          %v1748 = vadd.f32 %v1730, 1.0
          %v1749 = vadd.f32 %v1732, 1.0
          %v1750 = vadd.f32 %v1734, 1.0
          %v1751 = vrcp.pop %v1735
          %v1752 = vmul.f32 1.0, %v1751
          %v1753 = vrcp.pop %v1736
          %v1754 = vmul.f32 1.0, %v1753
          %v1755 = vrcp.pop %v1737
          %v1756 = vmul.f32 1.0, %v1755
          %v1757 = vrcp.pop %v1738
          %v1758 = vmul.f32 1.0, %v1757
          %v1759 = vrcp.pop %v1739
          %v1760 = vmul.f32 1.0, %v1759
          %v1761 = vrcp.pop %v1740
          %v1762 = vmul.f32 1.0, %v1761
          %v1763 = vrcp.pop %v1741
          %v1764 = vmul.f32 1.0, %v1763
          %v1765 = vrcp.pop %v1742
          %v1766 = vmul.f32 1.0, %v1765
          %v1767 = vrcp.pop %v1743
          %v1768 = vmul.f32 1.0, %v1767
          %v1769 = vrcp.pop %v1744
          %v1770 = vmul.f32 1.0, %v1769
          %v1771 = vrcp.pop %v1745
          %v1772 = vmul.f32 1.0, %v1771
          %v1773 = vrcp.pop %v1746
          %v1774 = vmul.f32 1.0, %v1773
          %v1775 = vrcp.pop %v1747
          %v1776 = vmul.f32 1.0, %v1775
          %v1777 = vrcp.pop %v1748
          %v1778 = vmul.f32 1.0, %v1777
          %v1779 = vrcp.pop %v1749
          %v1780 = vmul.f32 1.0, %v1779
          %v1781 = vrcp.pop %v1750
          %v1782 = vmul.f32 1.0, %v1781
          %1783 = vst [vmem:[%s397] sm:$0xff] %v1752
          %1784 = vst [vmem:[%s397 + $0x8] sm:$0xff] %v1754
          %1785 = vst [vmem:[%s397 + $0x10] sm:$0xff] %v1756
          %1786 = vst [vmem:[%s397 + $0x18] sm:$0xff] %v1758
          %1787 = vst [vmem:[%s397 + $0x20] sm:$0xff] %v1760
          %1788 = vst [vmem:[%s397 + $0x28] sm:$0xff] %v1762
          %1789 = vst [vmem:[%s397 + $0x30] sm:$0xff] %v1764
          %1790 = vst [vmem:[%s397 + $0x38] sm:$0xff] %v1766
          %1791 = vst [vmem:[%s397 + $0x40] sm:$0xff] %v1768
          %1792 = vst [vmem:[%s397 + $0x48] sm:$0xff] %v1770
          %1793 = vst [vmem:[%s397 + $0x50] sm:$0xff] %v1772
          %1794 = vst [vmem:[%s397 + $0x58] sm:$0xff] %v1774
          %1795 = vst [vmem:[%s397 + $0x60] sm:$0xff] %v1776
          %1796 = vst [vmem:[%s397 + $0x68] sm:$0xff] %v1778
          %1797 = vst [vmem:[%s397 + $0x70] sm:$0xff] %v1780
          %1798 = vst [vmem:[%s397 + $0x78] sm:$0xff] %v1782
        $region76: #{tpu_custom_call.1} parent=47 // pred_fallthru
          _
        %s1799 = sand.u32 %s208, 1
        %s1800 = scalar_lea.sflag [#allocation8], %s1799
        %s1801 = sand.u32 %s208, 1
        %s1802 = smul.addr %s1801, 128
        %s1803 = scalar_lea.vmem [#allocation15], %s1802
        // Predicated region
        $region77: #{tpu_custom_call.1} parent=47 // pred_check
          %p1804 = pneg %p218
        $region78: #{tpu_custom_call.1} parent=47 // pred_check_branch
          %1806 = sbr.rel (%p1804) target = $region80
        $region79: #{tpu_custom_call.1} parent=47 // pred_region
          %s1808 = ssub.s32 2048, 2048
          %1809 = vsyncadd %s1800, %s1808
          %s1810 = smul.addr %s33, 16
          %s1811 = smul.addr %s1810, 128
          %s1812 = scalar_lea.hbm %s7, %s1811
          %s1813 = sshll.u32 %s1803, 4
          %s1814 = int_to_ptr.vmem [resolvable:$true] %s1813
          %1819 = dma.vmem_to_hbm [thread:$0]  %s1814, 2048, %s1812, %s1800, 128, 128, 8
        $region80: #{tpu_custom_call.1} parent=47 // pred_fallthru
          _
      $region48: #{tpu_custom_call.1} parent=5 // pred_fallthru
        _
      %p1820 = scmp.le.s32.totalorder 2, %s24
      // Predicated region
      $region81: #{tpu_custom_call.1} parent=5 // pred_check
        %p1821 = pneg %p1820
      $region82: #{tpu_custom_call.1} parent=5 // pred_check_branch
        %1823 = sbr.rel (%p1821) target = $region84
      $region83: #{tpu_custom_call.1} parent=5 // pred_region
        %s1824 = ssub.s32 %s24, 2
        // Predicated region
        $region85: #{tpu_custom_call.1} parent=83 // pred_check
          %p1825 = pneg %p224
        $region86: #{tpu_custom_call.1} parent=83 // pred_check_branch
          %1827 = sbr.rel (%p1825) target = $region88
        $region87: #{tpu_custom_call.1} parent=83 // pred_region
          %s1828 = sand.u32 %s209, 1
          %s1829 = scalar_lea.sflag [#allocation8], %s1828
          %s1830 = sand.u32 %s209, 1
          %s1831 = smul.addr %s1830, 128
          %s1832 = scalar_lea.vmem [#allocation15], %s1831
          %1833 = dma.done %s1829, 2048
        $region88: #{tpu_custom_call.1} parent=83 // pred_fallthru
          _
      $region84: #{tpu_custom_call.1} parent=5 // pred_fallthru
        _
    $region6: #{tpu_custom_call.1} parent=1 // loop_footer
      %s28 = sadd.s32 1, %s24
    $region7: #{tpu_custom_call.1} parent=1 // loop_footer_branch
      %23 = sbr.rel target = $region3
    $region8: #{tpu_custom_call.1} parent=1 // loop_exit
      _
    %1834 = vsyncpa [#allocation7], 1
    %s1835 = scalar_lea.sflag [#allocation7], 1
    %1836 = vsyncpa %s1835, 1
    %1837 = vsyncpa [#allocation10], 1
    %s1838 = scalar_lea.sflag [#allocation10], 1
    %1839 = vsyncpa %s1838, 1
    %1840 = vsyncpa [#allocation13], 1
    %1841 = vsyncpa [#allocation8], 1
    %s1842 = scalar_lea.sflag [#allocation8], 1
    %1843 = vsyncpa %s1842, 1

</llo_original>
